<compile_context>
chip_gen: v7x
topology: tpu7x:2x2x1
jax: 0.10.0
libtpu: 0.0.40
codegen_flags: <defaults>
</compile_context>

<pallas_src>
import functools

import jax
import jax.numpy as jnp
import numpy as np
from jax.experimental import pallas as pl
from jax.experimental.pallas import tpu as pltpu


# ----------------------------------------------------------------------------
# Single fused kernel: 4x (GraphConv + ReLU) -> residual -> pool -> MLP head
# ----------------------------------------------------------------------------
def _net_fused_kernel(data_ref, w_ref, o_ref, *, n, f, h, c, g_pad, off):
    f32 = jnp.float32

    def wld(row, rows):
        # static ref slice (zero-cost view) -> load -> widen bf16 -> f32
        return w_ref[row:row + rows, :].astype(f32)

    # ---- unpack per-batch data slab (bf16 -> f32) ----
    adj = data_ref[off["adj"]:off["adj"] + n, 0:n].astype(f32)            # (N, N)
    x0 = data_ref[off["x"]:off["x"] + n, 0:f].astype(f32)                 # (N, F)
    mmean = data_ref[off["mmean"]:off["mmean"] + g_pad, 0:n].astype(f32)  # (Gp, N)
    maskt = data_ref[off["mask"]:off["mask"] + n, 0:g_pad].astype(f32)    # (N, Gp)

    # ---- unpack weights from the single parameter slab ----
    w1r, w1e = wld(off["wc1"], f), wld(off["wc1"] + f, f)
    w2r, w2e = wld(off["wc2"], h), wld(off["wc2"] + h, h)
    w3r, w3e = wld(off["wc3"], h), wld(off["wc3"] + h, h)        # reused twice
    wl1a, wl1b = wld(off["wl1"], h), wld(off["wl1"] + h, h)
    wl2p, wl3p = wld(off["wl2"], h), wld(off["wl3"], h)          # lane-padded head
    bias4 = wld(off["bias"], 4)                                  # bc1, bc2, bc3, bl1
    bc1, bc2, bc3, bl1 = (bias4[i:i + 1, :] for i in range(4))
    bh = wld(off["bh"], 2)                                       # bl2(pad), bl3(pad)
    bl2p, bl3p = bh[0:1, :], bh[1:2, :]

    # GraphConv + ReLU: two K<=128 matmuls accumulated in f32 (no concat temp).
    def gconv(xx, wr, we, b):
        agg = jnp.dot(adj, xx, preferred_element_type=f32)
        y = (jnp.dot(xx, wr, preferred_element_type=f32)
             + jnp.dot(agg, we, preferred_element_type=f32) + b)
        return jnp.maximum(y, 0.0)

    x1 = gconv(x0, w1r, w1e, bc1)
    x2 = gconv(x1, w2r, w2e, bc2)
    x3 = gconv(x2, w3r, w3e, bc3) + x1          # residual
    x4 = gconv(x3, w3r, w3e, bc3)               # conv3 reused (as in torch forward)

    # mean pool: 1/count folded into the membership matrix on host -> one matmul
    mean_pool = jnp.dot(mmean, x4, preferred_element_type=f32)            # (Gp, H)
    # max pool: host-prepared additive 0/-1e30 mask; pad graphs use an all-zero
    # mask column so padded rows stay finite (discarded on the host).
    max_pool = jnp.concatenate(
        [jnp.max(x4 + maskt[:, g:g + 1], axis=0, keepdims=True)
         for g in range(g_pad)], axis=0)                                   # (Gp, H)

    # MLP head: lin1 consumes [max_pool | mean_pool] as two accumulated matmuls.
    h1 = jnp.maximum(
        jnp.dot(max_pool, wl1a, preferred_element_type=f32)
        + jnp.dot(mean_pool, wl1b, preferred_element_type=f32) + bl1, 0.0)
    # TODO(synk): F.dropout(p=0.5, training=...) is identity in eval mode; a
    # training-mode path would need pltpu.prng_seed / prng_random_bits masking.
    h2 = jnp.maximum(
        jnp.dot(h1, wl2p, preferred_element_type=f32) + bl2p, 0.0)  # cols>=64 are 0
    logits = jnp.dot(h2, wl3p, preferred_element_type=f32) + bl3p   # cols>=C are 0

    # log_softmax over the C valid lanes; padded lanes masked out of the lse.
    col = jax.lax.broadcasted_iota(jnp.int32, logits.shape, 1)
    lmask = jnp.where(col < c, logits, jnp.float32(-1e30))
    mrow = jnp.max(lmask, axis=-1, keepdims=True)
    lse = mrow + jnp.log(jnp.sum(jnp.exp(lmask - mrow), axis=-1, keepdims=True))
    o_ref[...] = lmask - lse     # full (Gp, 128) lane-dense store; host slices (G, C)


def net_forward_fused(data_slab, w_slab, meta):
    B, data_rows, lane = data_slab.shape
    w_rows, wl = w_slab.shape
    g_pad = meta["g_pad"]
    kernel = functools.partial(
        _net_fused_kernel, n=meta["n"], f=meta["f"], h=meta["h"], c=meta["c"],
        g_pad=g_pad, off=meta["off"])
    # VMEM budget derived from actual (double-buffered) tile sizes + fixed
    # headroom for in-kernel temporaries; well under v7x's 64 MiB physical VMEM.
    tile_bytes = (w_rows * wl * 2) + (data_rows * lane * 2) + (g_pad * wl * 4)
    vmem_limit = 2 * tile_bytes + (16 << 20)
    # TODO(synk): for non-toy N, additionally grid the node dim with an
    # accumulator; size those tiles against v7x's 64 MiB VMEM (not 128 MiB).
    return pl.pallas_call(
        kernel,
        out_shape=jax.ShapeDtypeStruct((B, g_pad, wl), jnp.float32),
        grid=(B,),
        in_specs=[
            pl.BlockSpec((None, data_rows, lane), lambda b: (b, 0, 0)),  # per batch
            pl.BlockSpec((w_rows, wl), lambda b: (0, 0)),                # resident
        ],
        out_specs=pl.BlockSpec((None, g_pad, wl), lambda b: (b, 0, 0)),
        compiler_params=pltpu.CompilerParams(
            dimension_semantics=("parallel",),
            vmem_limit_bytes=int(vmem_limit)),
    )(data_slab, w_slab)


# ----------------------------------------------------------------------------
# Host-side packing: one bf16 parameter slab + one bf16 per-batch data slab
# ----------------------------------------------------------------------------
def prepare_inputs(params, x, adj, member, invcnt, *, g_pad=8):
    N = adj.shape[0]
    B, _, F = x.shape
    G = member.shape[0]
    H = params["conv2"][0].shape[0]
    C = params["lin3"][0].shape[1]
    lane = max(N, F)
    assert g_pad >= G and lane >= g_pad

    def r16(v):  # align sections to the bf16 (16, 128) sublane tile
        return ((v + 15) // 16) * 16

    # ---- per-batch data slab: [adj | x | mean-membership | additive max mask] ----
    off_adj, off_x = 0, r16(N)
    off_mme = off_x + r16(N)
    off_msk = off_mme + r16(g_pad)
    data_rows = off_msk + r16(N)

    adj_np = np.asarray(adj, np.float32)
    member_np = np.asarray(member, np.float32)
    mmean = member_np * np.asarray(invcnt, np.float32)                  # (G, N)
    mask_t = np.where(member_np.T > 0.5, 0.0, -1e30).astype(np.float32)  # (N, G)
    mask_t_pad = np.zeros((N, g_pad), np.float32)                        # pad graphs: 0
    mask_t_pad[:, :G] = mask_t

    data = np.zeros((B, data_rows, lane), np.float32)
    data[:, off_adj:off_adj + N, :N] = adj_np
    data[:, off_x:off_x + N, :F] = np.asarray(x, np.float32)
    data[:, off_mme:off_mme + G, :N] = mmean
    data[:, off_msk:off_msk + N, :g_pad] = mask_t_pad
    data_slab = jnp.asarray(data, jnp.bfloat16)

    # ---- single parameter slab (bf16, 128 lanes), 16-row aligned sections ----
    wc1r, wc1e, bc1 = params["conv1"]
    wc2r, wc2e, bc2 = params["conv2"]
    wc3r, wc3e, bc3 = params["conv3"]
    wl1, bl1 = params["lin1"]
    wl2, bl2 = params["lin2"]
    wl3, bl3 = params["lin3"]

    off_wc1 = 0
    off_wc2 = r16(2 * F)
    off_wc3 = off_wc2 + 2 * H
    off_wl1 = off_wc3 + 2 * H
    off_bias = off_wl1 + 2 * H
    off_wl2 = off_bias + 16
    off_wl3 = off_wl2 + H
    off_bh = off_wl3 + H
    w_rows = off_bh + 16

    w = np.zeros((w_rows, H), np.float32)
    w[off_wc1:off_wc1 + F] = np.asarray(wc1r)
    w[off_wc1 + F:off_wc1 + 2 * F] = np.asarray(wc1e)
    w[off_wc2:off_wc2 + H] = np.asarray(wc2r)
    w[off_wc2 + H:off_wc2 + 2 * H] = np.asarray(wc2e)
    w[off_wc3:off_wc3 + H] = np.asarray(wc3r)
    w[off_wc3 + H:off_wc3 + 2 * H] = np.asarray(wc3e)
    w[off_wl1:off_wl1 + 2 * H] = np.asarray(wl1)
    w[off_bias + 0] = np.asarray(bc1)[0]
    w[off_bias + 1] = np.asarray(bc2)[0]
    w[off_bias + 2] = np.asarray(bc3)[0]
    w[off_bias + 3] = np.asarray(bl1)[0]
    w[off_wl2:off_wl2 + H, :wl2.shape[1]] = np.asarray(wl2)     # lane-padded
    w[off_wl3:off_wl3 + wl3.shape[0], :C] = np.asarray(wl3)     # lane+row padded
    w[off_bh + 0, :wl2.shape[1]] = np.asarray(bl2)[0]
    w[off_bh + 1, :C] = np.asarray(bl3)[0]
    w_slab = jnp.asarray(w, jnp.bfloat16)

    off = dict(adj=off_adj, x=off_x, mmean=off_mme, mask=off_msk,
               wc1=off_wc1, wc2=off_wc2, wc3=off_wc3, wl1=off_wl1,
               bias=off_bias, wl2=off_wl2, wl3=off_wl3, bh=off_bh)
    meta = dict(n=N, f=F, h=H, c=C, g=G, g_pad=g_pad, off=off)

    # bf16-rounded f32 copies for the pure-JAX reference (same rounding path).
    def rf(a):
        return jnp.asarray(np.asarray(a, np.float32), jnp.bfloat16).astype(jnp.float32)

    ref = dict(
        adj=rf(adj_np), x=rf(np.asarray(x, np.float32)),
        mmean=rf(mmean), mask_t=rf(mask_t),
        conv1=(rf(wc1r), rf(wc1e), rf(bc1)),
        conv2=(rf(wc2r), rf(wc2e), rf(bc2)),
        conv3=(rf(wc3r), rf(wc3e), rf(bc3)),
        lin1=(rf(wl1), rf(bl1)), lin2=(rf(wl2), rf(bl2)), lin3=(rf(wl3), rf(bl3)),
    )
    return data_slab, w_slab, ref, meta


# ----------------------------------------------------------------------------
# Pure-JAX reference for verification (uses the same bf16-rounded values)
# ----------------------------------------------------------------------------
def ref_forward(ref, num_graphs):
    adj, mmean, mask_t = ref["adj"], ref["mmean"], ref["mask_t"]

    def gconv(xx, wr, we, b):
        return jnp.maximum(xx @ wr + (adj @ xx) @ we + b, 0.0)

    def one(xb):
        x1 = gconv(xb, *ref["conv1"])
        x2 = gconv(x1, *ref["conv2"])
        x3 = gconv(x2, *ref["conv3"]) + x1
        x4 = gconv(x3, *ref["conv3"])
        mean = mmean @ x4
        maxs = [jnp.max(x4 + mask_t[:, g:g + 1], axis=0) for g in range(num_graphs)]
        pooled = jnp.concatenate([jnp.stack(maxs, axis=0), mean], axis=1)
        w1, b1 = ref["lin1"]
        w2, b2 = ref["lin2"]
        w3, b3 = ref["lin3"]
        h1 = jnp.maximum(pooled @ w1 + b1, 0.0)
        h2 = jnp.maximum(h1 @ w2 + b2, 0.0)
        logits = h2 @ w3 + b3
        return logits - jax.scipy.special.logsumexp(logits, axis=-1, keepdims=True)

    return jax.vmap(one)(ref["x"])


# ----------------------------------------------------------------------------
# Deterministic parameter init and a small synthetic batched graph
# ----------------------------------------------------------------------------
def make_params(key, num_features, hidden, num_classes):
    def linear(k, fan_in, fan_out):
        kw, kb = jax.random.split(k)
        w = jax.random.normal(kw, (fan_in, fan_out), jnp.float32) / np.sqrt(fan_in)
        b = jax.random.normal(kb, (1, fan_out), jnp.float32) * 0.01
        return w, b

    keys = jax.random.split(key, 16)
    params = {}
    for i, (name, fin) in enumerate(
            [("conv1", num_features), ("conv2", hidden), ("conv3", hidden)]):
        wroot, _ = linear(keys[2 * i], fin, hidden)
        wrel, b = linear(keys[2 * i + 1], fin, hidden)
        params[name] = (wroot, wrel, b)
    # conv4 exists in __init__ but is unused in forward -> not materialized.
    params["lin1"] = linear(keys[8], 2 * hidden, hidden)
    params["lin2"] = linear(keys[9], hidden, 64)
    params["lin3"] = linear(keys[10], 64, num_classes)
    return params


def make_graph():
    num_nodes = 16
    batch = np.array([0] * 7 + [1] * 9, dtype=np.int32)
    edges = []
    for i in range(7):                       # ring within graph 0 (nodes 0..6)
        j = (i + 1) % 7
        edges += [(i, j), (j, i)]
    for i in range(9):                       # ring within graph 1 (nodes 7..15)
        j = (i + 1) % 9
        edges += [(7 + i, 7 + j), (7 + j, 7 + i)]
    edges += [(0, 3), (3, 0), (8, 12), (12, 8)]

    adj = np.zeros((num_nodes, num_nodes), dtype=np.float32)
    for src, dst in edges:
        adj[dst, src] = 1.0                  # messages flow src -> dst

    num_graphs = int(batch.max()) + 1
    member = np.zeros((num_graphs, num_nodes), dtype=np.float32)
    member[batch, np.arange(num_nodes)] = 1.0
    invcnt = (1.0 / member.sum(axis=1, keepdims=True)).astype(np.float32)
    return adj, member, invcnt


if __name__ == "__main__":
    NUM_FEATURES = 16     # dataset.num_features
    HIDDEN = 128
    NUM_CLASSES = 6       # dataset.num_classes
    BATCH = 4             # macro-batch of packed graph sets (parallel grid axis)

    key = jax.random.PRNGKey(0)
    k_param, k_x = jax.random.split(key)

    params = make_params(k_param, NUM_FEATURES, HIDDEN, NUM_CLASSES)
    adj, member, invcnt = make_graph()
    x = jax.random.normal(k_x, (BATCH, adj.shape[0], NUM_FEATURES), jnp.float32)

    data_slab, w_slab, ref, meta = prepare_inputs(params, x, adj, member, invcnt)

    out_pad = net_forward_fused(data_slab, w_slab, meta)
    out_pad = jax.block_until_ready(out_pad)
    out = np.asarray(out_pad)[:, :meta["g"], :meta["c"]]   # drop lane/row padding

    expected = np.asarray(ref_forward(ref, meta["g"]))
    np.testing.assert_allclose(out, expected, rtol=1e-4, atol=1e-4)
    assert out.shape == (BATCH, member.shape[0], NUM_CLASSES)
    print("KERNEL_OK")
</pallas_src>

<mosaic_0001>
module attributes {stable_mosaic.version = 11 : i64} {
  func.func @_net_fused_kernel(%arg0: i32, %arg1: memref<1x64x16xbf16, #tpu.memory_space<vmem>>, %arg2: memref<1088x128xbf16, #tpu.memory_space<vmem>>, %arg3: memref<1x8x128xf32, #tpu.memory_space<vmem>>) attributes {dimension_semantics = [#tpu.dimension_semantics<parallel>], iteration_bounds = array<i64: 4>, scalar_prefetch = 0 : i64, scratch_operands = 0 : i64, tpu.core_type = #tpu.core_type<tc>, window_params = [{transform_indices = @transform_0, window_bounds = array<i64: 1, 64, 16>}, {pipeline_mode = #tpu.pipeline_mode<synchronous>, transform_indices = @transform_1, window_bounds = array<i64: 1088, 128>}, {transform_indices = @transform_2, window_bounds = array<i64: 1, 8, 128>}]} {
    %c0 = arith.constant 0 : index
    %c0_0 = arith.constant 0 : index
    %c0_1 = arith.constant 0 : index
    %0 = vector.load %arg1[%c0, %c0_0, %c0_1] : memref<1x64x16xbf16, #tpu.memory_space<vmem>>, vector<1x16x16xbf16>
    %1 = vector.shape_cast %0 : vector<1x16x16xbf16> to vector<16x16xbf16>
    %2 = arith.extf %1 : vector<16x16xbf16> to vector<16x16xf32>
    %c0_2 = arith.constant 0 : index
    %c16 = arith.constant 16 : index
    %c0_3 = arith.constant 0 : index
    %3 = vector.load %arg1[%c0_2, %c16, %c0_3] : memref<1x64x16xbf16, #tpu.memory_space<vmem>>, vector<1x16x16xbf16>
    %4 = vector.shape_cast %3 : vector<1x16x16xbf16> to vector<16x16xbf16>
    %5 = arith.extf %4 : vector<16x16xbf16> to vector<16x16xf32>
    %c0_4 = arith.constant 0 : index
    %c32 = arith.constant 32 : index
    %c0_5 = arith.constant 0 : index
    %6 = vector.load %arg1[%c0_4, %c32, %c0_5] : memref<1x64x16xbf16, #tpu.memory_space<vmem>>, vector<1x8x16xbf16>
    %7 = vector.shape_cast %6 : vector<1x8x16xbf16> to vector<8x16xbf16>
    %8 = arith.extf %7 : vector<8x16xbf16> to vector<8x16xf32>
    %c0_6 = arith.constant 0 : index
    %c48 = arith.constant 48 : index
    %c0_7 = arith.constant 0 : index
    %9 = vector.load %arg1[%c0_6, %c48, %c0_7] : memref<1x64x16xbf16, #tpu.memory_space<vmem>>, vector<1x16x8xbf16>
    %10 = vector.shape_cast %9 : vector<1x16x8xbf16> to vector<16x8xbf16>
    %11 = arith.extf %10 : vector<16x8xbf16> to vector<16x8xf32>
    %c0_8 = arith.constant 0 : index
    %c0_9 = arith.constant 0 : index
    %12 = vector.load %arg2[%c0_8, %c0_9] : memref<1088x128xbf16, #tpu.memory_space<vmem>>, vector<16x128xbf16>
    %13 = arith.extf %12 : vector<16x128xbf16> to vector<16x128xf32>
    %c16_10 = arith.constant 16 : index
    %c0_11 = arith.constant 0 : index
    %14 = vector.load %arg2[%c16_10, %c0_11] : memref<1088x128xbf16, #tpu.memory_space<vmem>>, vector<16x128xbf16>
    %15 = arith.extf %14 : vector<16x128xbf16> to vector<16x128xf32>
    %c32_12 = arith.constant 32 : index
    %c0_13 = arith.constant 0 : index
    %16 = vector.load %arg2[%c32_12, %c0_13] : memref<1088x128xbf16, #tpu.memory_space<vmem>>, vector<128x128xbf16>
    %17 = arith.extf %16 : vector<128x128xbf16> to vector<128x128xf32>
    %c160 = arith.constant 160 : index
    %c0_14 = arith.constant 0 : index
    %18 = vector.load %arg2[%c160, %c0_14] : memref<1088x128xbf16, #tpu.memory_space<vmem>>, vector<128x128xbf16>
    %19 = arith.extf %18 : vector<128x128xbf16> to vector<128x128xf32>
    %c288 = arith.constant 288 : index
    %c0_15 = arith.constant 0 : index
    %20 = vector.load %arg2[%c288, %c0_15] : memref<1088x128xbf16, #tpu.memory_space<vmem>>, vector<128x128xbf16>
    %21 = arith.extf %20 : vector<128x128xbf16> to vector<128x128xf32>
    %c416 = arith.constant 416 : index
    %c0_16 = arith.constant 0 : index
    %22 = vector.load %arg2[%c416, %c0_16] : memref<1088x128xbf16, #tpu.memory_space<vmem>>, vector<128x128xbf16>
    %23 = arith.extf %22 : vector<128x128xbf16> to vector<128x128xf32>
    %c544 = arith.constant 544 : index
    %c0_17 = arith.constant 0 : index
    %24 = vector.load %arg2[%c544, %c0_17] : memref<1088x128xbf16, #tpu.memory_space<vmem>>, vector<128x128xbf16>
    %25 = arith.extf %24 : vector<128x128xbf16> to vector<128x128xf32>
    %c672 = arith.constant 672 : index
    %c0_18 = arith.constant 0 : index
    %26 = vector.load %arg2[%c672, %c0_18] : memref<1088x128xbf16, #tpu.memory_space<vmem>>, vector<128x128xbf16>
    %27 = arith.extf %26 : vector<128x128xbf16> to vector<128x128xf32>
    %c816 = arith.constant 816 : index
    %c0_19 = arith.constant 0 : index
    %28 = vector.load %arg2[%c816, %c0_19] : memref<1088x128xbf16, #tpu.memory_space<vmem>>, vector<128x128xbf16>
    %29 = arith.extf %28 : vector<128x128xbf16> to vector<128x128xf32>
    %c944 = arith.constant 944 : index
    %c0_20 = arith.constant 0 : index
    %30 = vector.load %arg2[%c944, %c0_20] : memref<1088x128xbf16, #tpu.memory_space<vmem>>, vector<128x128xbf16>
    %31 = arith.extf %30 : vector<128x128xbf16> to vector<128x128xf32>
    %c800 = arith.constant 800 : index
    %c0_21 = arith.constant 0 : index
    %32 = vector.load %arg2[%c800, %c0_21] : memref<1088x128xbf16, #tpu.memory_space<vmem>>, vector<4x128xbf16>
    %33 = arith.extf %32 : vector<4x128xbf16> to vector<4x128xf32>
    %34 = vector.extract_strided_slice %33 {offsets = [0, 0], sizes = [1, 128], strides = [1, 1]} : vector<4x128xf32> to vector<1x128xf32>
    %35 = vector.extract_strided_slice %33 {offsets = [1, 0], sizes = [1, 128], strides = [1, 1]} : vector<4x128xf32> to vector<1x128xf32>
    %36 = vector.extract_strided_slice %33 {offsets = [2, 0], sizes = [1, 128], strides = [1, 1]} : vector<4x128xf32> to vector<1x128xf32>
    %37 = vector.extract_strided_slice %33 {offsets = [3, 0], sizes = [1, 128], strides = [1, 1]} : vector<4x128xf32> to vector<1x128xf32>
    %c1072 = arith.constant 1072 : index
    %c0_22 = arith.constant 0 : index
    %38 = vector.load %arg2[%c1072, %c0_22] : memref<1088x128xbf16, #tpu.memory_space<vmem>>, vector<2x128xbf16>
    %39 = arith.extf %38 : vector<2x128xbf16> to vector<2x128xf32>
    %40 = vector.extract_strided_slice %39 {offsets = [0, 0], sizes = [1, 128], strides = [1, 1]} : vector<2x128xf32> to vector<1x128xf32>
    %41 = vector.extract_strided_slice %39 {offsets = [1, 0], sizes = [1, 128], strides = [1, 1]} : vector<2x128xf32> to vector<1x128xf32>
    %cst = arith.constant dense<0.000000e+00> : vector<16x16xf32>
    %42 = tpu.matmul %2, %5, %cst {dimension_numbers = #tpu.dot_dimension_numbers<[1], [0], [0], [1], [0, 0, 1, 1], [], []>} : vector<16x16xf32>, vector<16x16xf32>, vector<16x16xf32> -> vector<16x16xf32>
    %cst_23 = arith.constant dense<0.000000e+00> : vector<16x128xf32>
    %43 = tpu.matmul %5, %13, %cst_23 {dimension_numbers = #tpu.dot_dimension_numbers<[1], [0], [0], [1], [0, 0, 1, 1], [], []>} : vector<16x16xf32>, vector<16x128xf32>, vector<16x128xf32> -> vector<16x128xf32>
    %cst_24 = arith.constant dense<0.000000e+00> : vector<16x128xf32>
    %44 = tpu.matmul %42, %15, %cst_24 {dimension_numbers = #tpu.dot_dimension_numbers<[1], [0], [0], [1], [0, 0, 1, 1], [], []>} : vector<16x16xf32>, vector<16x128xf32>, vector<16x128xf32> -> vector<16x128xf32>
    %45 = arith.addf %43, %44 : vector<16x128xf32>
    %46 = vector.broadcast %34 : vector<1x128xf32> to vector<16x128xf32>
    %47 = arith.addf %45, %46 : vector<16x128xf32>
    %cst_25 = arith.constant 0.000000e+00 : f32
    %48 = vector.broadcast %cst_25 : f32 to vector<16x128xf32>
    %49 = arith.maximumf %47, %48 : vector<16x128xf32>
    %cst_26 = arith.constant dense<0.000000e+00> : vector<16x128xf32>
    %50 = tpu.matmul %2, %49, %cst_26 {dimension_numbers = #tpu.dot_dimension_numbers<[1], [0], [0], [1], [0, 0, 1, 1], [], []>} : vector<16x16xf32>, vector<16x128xf32>, vector<16x128xf32> -> vector<16x128xf32>
    %cst_27 = arith.constant dense<0.000000e+00> : vector<16x128xf32>
    %51 = tpu.matmul %49, %17, %cst_27 {dimension_numbers = #tpu.dot_dimension_numbers<[1], [0], [0], [1], [0, 0, 1, 1], [], []>} : vector<16x128xf32>, vector<128x128xf32>, vector<16x128xf32> -> vector<16x128xf32>
    %cst_28 = arith.constant dense<0.000000e+00> : vector<16x128xf32>
    %52 = tpu.matmul %50, %19, %cst_28 {dimension_numbers = #tpu.dot_dimension_numbers<[1], [0], [0], [1], [0, 0, 1, 1], [], []>} : vector<16x128xf32>, vector<128x128xf32>, vector<16x128xf32> -> vector<16x128xf32>
    %53 = arith.addf %51, %52 : vector<16x128xf32>
    %54 = vector.broadcast %35 : vector<1x128xf32> to vector<16x128xf32>
    %55 = arith.addf %53, %54 : vector<16x128xf32>
    %cst_29 = arith.constant 0.000000e+00 : f32
    %56 = vector.broadcast %cst_29 : f32 to vector<16x128xf32>
    %57 = arith.maximumf %55, %56 : vector<16x128xf32>
    %cst_30 = arith.constant dense<0.000000e+00> : vector<16x128xf32>
    %58 = tpu.matmul %2, %57, %cst_30 {dimension_numbers = #tpu.dot_dimension_numbers<[1], [0], [0], [1], [0, 0, 1, 1], [], []>} : vector<16x16xf32>, vector<16x128xf32>, vector<16x128xf32> -> vector<16x128xf32>
    %cst_31 = arith.constant dense<0.000000e+00> : vector<16x128xf32>
    %59 = tpu.matmul %57, %21, %cst_31 {dimension_numbers = #tpu.dot_dimension_numbers<[1], [0], [0], [1], [0, 0, 1, 1], [], []>} : vector<16x128xf32>, vector<128x128xf32>, vector<16x128xf32> -> vector<16x128xf32>
    %cst_32 = arith.constant dense<0.000000e+00> : vector<16x128xf32>
    %60 = tpu.matmul %58, %23, %cst_32 {dimension_numbers = #tpu.dot_dimension_numbers<[1], [0], [0], [1], [0, 0, 1, 1], [], []>} : vector<16x128xf32>, vector<128x128xf32>, vector<16x128xf32> -> vector<16x128xf32>
    %61 = arith.addf %59, %60 : vector<16x128xf32>
    %62 = vector.broadcast %36 : vector<1x128xf32> to vector<16x128xf32>
    %63 = arith.addf %61, %62 : vector<16x128xf32>
    %cst_33 = arith.constant 0.000000e+00 : f32
    %64 = vector.broadcast %cst_33 : f32 to vector<16x128xf32>
    %65 = arith.maximumf %63, %64 : vector<16x128xf32>
    %66 = arith.addf %65, %49 : vector<16x128xf32>
    %cst_34 = arith.constant dense<0.000000e+00> : vector<16x128xf32>
    %67 = tpu.matmul %2, %66, %cst_34 {dimension_numbers = #tpu.dot_dimension_numbers<[1], [0], [0], [1], [0, 0, 1, 1], [], []>} : vector<16x16xf32>, vector<16x128xf32>, vector<16x128xf32> -> vector<16x128xf32>
    %cst_35 = arith.constant dense<0.000000e+00> : vector<16x128xf32>
    %68 = tpu.matmul %66, %21, %cst_35 {dimension_numbers = #tpu.dot_dimension_numbers<[1], [0], [0], [1], [0, 0, 1, 1], [], []>} : vector<16x128xf32>, vector<128x128xf32>, vector<16x128xf32> -> vector<16x128xf32>
    %cst_36 = arith.constant dense<0.000000e+00> : vector<16x128xf32>
    %69 = tpu.matmul %67, %23, %cst_36 {dimension_numbers = #tpu.dot_dimension_numbers<[1], [0], [0], [1], [0, 0, 1, 1], [], []>} : vector<16x128xf32>, vector<128x128xf32>, vector<16x128xf32> -> vector<16x128xf32>
    %70 = arith.addf %68, %69 : vector<16x128xf32>
    %71 = vector.broadcast %36 : vector<1x128xf32> to vector<16x128xf32>
    %72 = arith.addf %70, %71 : vector<16x128xf32>
    %cst_37 = arith.constant 0.000000e+00 : f32
    %73 = vector.broadcast %cst_37 : f32 to vector<16x128xf32>
    %74 = arith.maximumf %72, %73 : vector<16x128xf32>
    %cst_38 = arith.constant dense<0.000000e+00> : vector<8x128xf32>
    %75 = tpu.matmul %8, %74, %cst_38 {dimension_numbers = #tpu.dot_dimension_numbers<[1], [0], [0], [1], [0, 0, 1, 1], [], []>} : vector<8x16xf32>, vector<16x128xf32>, vector<8x128xf32> -> vector<8x128xf32>
    %76 = vector.extract_strided_slice %11 {offsets = [0, 0], sizes = [16, 1], strides = [1, 1]} : vector<16x8xf32> to vector<16x1xf32>
    %77 = vector.broadcast %76 : vector<16x1xf32> to vector<16x128xf32>
    %78 = arith.addf %74, %77 : vector<16x128xf32>
    %cst_39 = arith.constant dense<0xFF800000> : vector<128xf32>
    %79 = vector.multi_reduction <maximumf>, %78, %cst_39 [0] : vector<16x128xf32> to vector<128xf32>
    %80 = vector.shape_cast %79 : vector<128xf32> to vector<1x128xf32>
    %81 = vector.extract_strided_slice %11 {offsets = [0, 1], sizes = [16, 1], strides = [1, 1]} : vector<16x8xf32> to vector<16x1xf32>
    %82 = vector.broadcast %81 : vector<16x1xf32> to vector<16x128xf32>
    %83 = arith.addf %74, %82 : vector<16x128xf32>
    %cst_40 = arith.constant dense<0xFF800000> : vector<128xf32>
    %84 = vector.multi_reduction <maximumf>, %83, %cst_40 [0] : vector<16x128xf32> to vector<128xf32>
    %85 = vector.shape_cast %84 : vector<128xf32> to vector<1x128xf32>
    %86 = vector.extract_strided_slice %11 {offsets = [0, 2], sizes = [16, 1], strides = [1, 1]} : vector<16x8xf32> to vector<16x1xf32>
    %87 = vector.broadcast %86 : vector<16x1xf32> to vector<16x128xf32>
    %88 = arith.addf %74, %87 : vector<16x128xf32>
    %cst_41 = arith.constant dense<0xFF800000> : vector<128xf32>
    %89 = vector.multi_reduction <maximumf>, %88, %cst_41 [0] : vector<16x128xf32> to vector<128xf32>
    %90 = vector.shape_cast %89 : vector<128xf32> to vector<1x128xf32>
    %91 = vector.extract_strided_slice %11 {offsets = [0, 3], sizes = [16, 1], strides = [1, 1]} : vector<16x8xf32> to vector<16x1xf32>
    %92 = vector.broadcast %91 : vector<16x1xf32> to vector<16x128xf32>
    %93 = arith.addf %74, %92 : vector<16x128xf32>
    %cst_42 = arith.constant dense<0xFF800000> : vector<128xf32>
    %94 = vector.multi_reduction <maximumf>, %93, %cst_42 [0] : vector<16x128xf32> to vector<128xf32>
    %95 = vector.shape_cast %94 : vector<128xf32> to vector<1x128xf32>
    %96 = vector.extract_strided_slice %11 {offsets = [0, 4], sizes = [16, 1], strides = [1, 1]} : vector<16x8xf32> to vector<16x1xf32>
    %97 = vector.broadcast %96 : vector<16x1xf32> to vector<16x128xf32>
    %98 = arith.addf %74, %97 : vector<16x128xf32>
    %cst_43 = arith.constant dense<0xFF800000> : vector<128xf32>
    %99 = vector.multi_reduction <maximumf>, %98, %cst_43 [0] : vector<16x128xf32> to vector<128xf32>
    %100 = vector.shape_cast %99 : vector<128xf32> to vector<1x128xf32>
    %101 = vector.extract_strided_slice %11 {offsets = [0, 5], sizes = [16, 1], strides = [1, 1]} : vector<16x8xf32> to vector<16x1xf32>
    %102 = vector.broadcast %101 : vector<16x1xf32> to vector<16x128xf32>
    %103 = arith.addf %74, %102 : vector<16x128xf32>
    %cst_44 = arith.constant dense<0xFF800000> : vector<128xf32>
    %104 = vector.multi_reduction <maximumf>, %103, %cst_44 [0] : vector<16x128xf32> to vector<128xf32>
    %105 = vector.shape_cast %104 : vector<128xf32> to vector<1x128xf32>
    %106 = vector.extract_strided_slice %11 {offsets = [0, 6], sizes = [16, 1], strides = [1, 1]} : vector<16x8xf32> to vector<16x1xf32>
    %107 = vector.broadcast %106 : vector<16x1xf32> to vector<16x128xf32>
    %108 = arith.addf %74, %107 : vector<16x128xf32>
    %cst_45 = arith.constant dense<0xFF800000> : vector<128xf32>
    %109 = vector.multi_reduction <maximumf>, %108, %cst_45 [0] : vector<16x128xf32> to vector<128xf32>
    %110 = vector.shape_cast %109 : vector<128xf32> to vector<1x128xf32>
    %111 = vector.extract_strided_slice %11 {offsets = [0, 7], sizes = [16, 1], strides = [1, 1]} : vector<16x8xf32> to vector<16x1xf32>
    %112 = vector.broadcast %111 : vector<16x1xf32> to vector<16x128xf32>
    %113 = arith.addf %74, %112 : vector<16x128xf32>
    %cst_46 = arith.constant dense<0xFF800000> : vector<128xf32>
    %114 = vector.multi_reduction <maximumf>, %113, %cst_46 [0] : vector<16x128xf32> to vector<128xf32>
    %115 = vector.shape_cast %114 : vector<128xf32> to vector<1x128xf32>
    %116 = tpu.concatenate %80, %85, %90, %95, %100, %105, %110, %115 in 0 : vector<1x128xf32>, vector<1x128xf32>, vector<1x128xf32>, vector<1x128xf32>, vector<1x128xf32>, vector<1x128xf32>, vector<1x128xf32>, vector<1x128xf32> -> vector<8x128xf32>
    %cst_47 = arith.constant dense<0.000000e+00> : vector<8x128xf32>
    %117 = tpu.matmul %116, %25, %cst_47 {dimension_numbers = #tpu.dot_dimension_numbers<[1], [0], [0], [1], [0, 0, 1, 1], [], []>} : vector<8x128xf32>, vector<128x128xf32>, vector<8x128xf32> -> vector<8x128xf32>
    %cst_48 = arith.constant dense<0.000000e+00> : vector<8x128xf32>
    %118 = tpu.matmul %75, %27, %cst_48 {dimension_numbers = #tpu.dot_dimension_numbers<[1], [0], [0], [1], [0, 0, 1, 1], [], []>} : vector<8x128xf32>, vector<128x128xf32>, vector<8x128xf32> -> vector<8x128xf32>
    %119 = arith.addf %117, %118 : vector<8x128xf32>
    %120 = vector.broadcast %37 : vector<1x128xf32> to vector<8x128xf32>
    %121 = arith.addf %119, %120 : vector<8x128xf32>
    %cst_49 = arith.constant 0.000000e+00 : f32
    %122 = vector.broadcast %cst_49 : f32 to vector<8x128xf32>
    %123 = arith.maximumf %121, %122 : vector<8x128xf32>
    %cst_50 = arith.constant dense<0.000000e+00> : vector<8x128xf32>
    %124 = tpu.matmul %123, %29, %cst_50 {dimension_numbers = #tpu.dot_dimension_numbers<[1], [0], [0], [1], [0, 0, 1, 1], [], []>} : vector<8x128xf32>, vector<128x128xf32>, vector<8x128xf32> -> vector<8x128xf32>
    %125 = vector.broadcast %40 : vector<1x128xf32> to vector<8x128xf32>
    %126 = arith.addf %124, %125 : vector<8x128xf32>
    %cst_51 = arith.constant 0.000000e+00 : f32
    %127 = vector.broadcast %cst_51 : f32 to vector<8x128xf32>
    %128 = arith.maximumf %126, %127 : vector<8x128xf32>
    %cst_52 = arith.constant dense<0.000000e+00> : vector<8x128xf32>
    %129 = tpu.matmul %128, %31, %cst_52 {dimension_numbers = #tpu.dot_dimension_numbers<[1], [0], [0], [1], [0, 0, 1, 1], [], []>} : vector<8x128xf32>, vector<128x128xf32>, vector<8x128xf32> -> vector<8x128xf32>
    %130 = vector.broadcast %41 : vector<1x128xf32> to vector<8x128xf32>
    %131 = arith.addf %129, %130 : vector<8x128xf32>
    %132 = tpu.iota {dimensions = array<i32: 1>} : vector<8x128xi32>
    %c6_i32 = arith.constant 6 : i32
    %133 = vector.broadcast %c6_i32 : i32 to vector<8x128xi32>
    %134 = arith.cmpi slt, %132, %133 : vector<8x128xi32>
    %cst_53 = arith.constant -1.000000e+30 : f32
    %135 = vector.broadcast %cst_53 : f32 to vector<8x128xf32>
    %136 = arith.select %134, %131, %135 : vector<8x128xi1>, vector<8x128xf32>
    %cst_54 = arith.constant dense<0xFF800000> : vector<8xf32>
    %137 = vector.multi_reduction <maximumf>, %136, %cst_54 [1] : vector<8x128xf32> to vector<8xf32>
    %138 = vector.shape_cast %137 : vector<8xf32> to vector<8x1xf32>
    %139 = vector.broadcast %138 : vector<8x1xf32> to vector<8x128xf32>
    %140 = arith.subf %136, %139 : vector<8x128xf32>
    %141 = math.exp %140 : vector<8x128xf32>
    %cst_55 = arith.constant dense<0.000000e+00> : vector<8xf32>
    %142 = vector.multi_reduction <add>, %141, %cst_55 [1] : vector<8x128xf32> to vector<8xf32>
    %143 = vector.shape_cast %142 : vector<8xf32> to vector<8x1xf32>
    %144 = math.log %143 : vector<8x1xf32>
    %145 = arith.addf %138, %144 : vector<8x1xf32>
    %146 = vector.broadcast %145 : vector<8x1xf32> to vector<8x128xf32>
    %147 = arith.subf %136, %146 : vector<8x128xf32>
    %c0_56 = arith.constant 0 : index
    %c0_57 = arith.constant 0 : index
    %c0_58 = arith.constant 0 : index
    %148 = vector.load %arg3[%c0_56, %c0_57, %c0_58] : memref<1x8x128xf32, #tpu.memory_space<vmem>>, vector<1x8x128xf32>
    %149 = vector.shape_cast %148 : vector<1x8x128xf32> to vector<8x128xf32>
    %150 = vector.shape_cast %147 : vector<8x128xf32> to vector<1x8x128xf32>
    tpu.vector_store %arg3[%c0_56, %c0_57, %c0_58], %150 {strides = array<i32>} : memref<1x8x128xf32, #tpu.memory_space<vmem>>, vector<1x8x128xf32>,
    return
  }
  func.func @transform_0(%arg0: i32) -> (i32, i32, i32) {
    %c0_i32 = arith.constant 0 : i32
    %c0_i32_0 = arith.constant 0 : i32
    %c0_i32_1 = arith.constant 0 : i32
    return %arg0, %c0_i32, %c0_i32_0 : i32, i32, i32
  }
  func.func @transform_1(%arg0: i32) -> (i32, i32) {
    %c0_i32 = arith.constant 0 : i32
    %c0_i32_0 = arith.constant 0 : i32
    %c0_i32_1 = arith.constant 0 : i32
    return %c0_i32, %c0_i32_0 : i32, i32
  }
  func.func @transform_2(%arg0: i32) -> (i32, i32, i32) {
    %c0_i32 = arith.constant 0 : i32
    %c0_i32_0 = arith.constant 0 : i32
    %c0_i32_1 = arith.constant 0 : i32
    return %arg0, %c0_i32, %c0_i32_0 : i32, i32, i32
  }
}

</mosaic_0001>

<llo_original>
// kernel: tpu_custom_call.1
$region0: #{tpu_custom_call.1}
  #allocation0 [shape = 'u32[]', space=smem, size = 0x4, offset = 0x4, fixed_abs, tag = 'smem constant byte address 0x4 - core index']
  #allocation1 [shape = 'u32[144,128]{1,0:T(1,128)}', space=vmem, size = 0x12000, scoped, tag = 'internal scratch']
  %s0 = inlined_call_operand.vmem [shape: bf16[4,64,16], index: 0, kind: input, shape index: {}]
  %s1 = inlined_call_operand.hbm [shape: bf16[1088,128], index: 1, kind: input, shape index: {}]
  %s2 = inlined_call_operand.hbm [shape: f32[4,8,128], index: 2, kind: output, shape index: {}]
  %s3 = sld [smem:[#allocation0]]
  $region45: #{tpu_custom_call.1} parent=0
    _
  %s5 = ssub.s32 1, %s3
  %s6 = scalar_select 0, %s5, %s3
  $region1: #{tpu_custom_call.1} parent=0
    #allocation2 [shape = 'u8[278528]{0}', space=vmem, size = 0x44000, scoped, tag = 'input window, operand 1, single buffered']
    #allocation3 [shape = 's32[2]{0}', space=sflag, size = 0x8, scoped, tag = 'scoped memory for tpu_custom_call.1']
    #allocation4 [shape = 's32[2]{0}', space=sflag, size = 0x8, scoped, tag = 'scoped memory for tpu_custom_call.1']
    #allocation5 [shape = 'u8[8192]{0}', space=vmem, size = 0x2000, scoped, tag = 'output window, operand 0']
    %7 = vsyncpa [#allocation3], 0
    %8 = vsyncpa [#allocation4], 0
    %s9 = scalar_lea.sflag [#allocation4], 1
    %10 = vsyncpa %s9, 0
    loop: start=0, step=1, limit=6
    $region2: #{tpu_custom_call.1} parent=1 // loop_pre_header
      _
    $region3: #{tpu_custom_call.1} parent=1 // loop_header
      %s12 = sphi 0, %s16
      %p13 = scmp.ge.s32.totalorder %s12, 6
      %s22 = sphi 0, %s24
      %s25 = sphi 0, %s22
      %s26 = sphi 0, %s25
      %s42 = sphi 0, %s26
      %s46 = sphi 0, %s46
      %s48 = sphi 0, %s46
      %s49 = sphi 0, %s48
      %s63 = sphi 0, %s49
      %s69 = sphi 0, %s71
      %s72 = sphi 0, %s69
      %s73 = sphi 0, %s72
      %s89 = sphi 0, %s73
    $region4: #{tpu_custom_call.1} parent=1 // loop_header_branch
      %15 = sbr.rel (%p13) target = $region8
    $region5: #{tpu_custom_call.1} parent=1 // loop_body
      %s17 = ssub.s32 %s12, 1
      %s18 = ssub.s32 %s12, 2
      %s19 = sadd.s32 %s12, 1
      %s20 = ssub.s32 %s12, %s19
      %p21 = scmp.eq.s32.totalorder %s20, 0
      %s23 = sadd.s32 %s22, 1
      %s24 = scalar_select %p21, %s22, %s23
      %p27 = pneg %p21
      %p28 = scmp.eq.s32.totalorder %s12, 3
      %p29 = por %p27, %p28
      %p30 = scmp.ne.s32.totalorder %s22, %s25
      %p31 = scmp.eq.s32.totalorder %s12, 0
      %p32 = por %p30, %p31
      %p33 = scmp.ne.s32.totalorder %s22, %s25
      %p34 = scmp.eq.s32.totalorder %s17, 3
      %p35 = por %p33, %p34
      %p36 = scmp.ne.s32.totalorder %s25, %s26
      %p37 = scmp.eq.s32.totalorder %s17, 0
      %p38 = por %p36, %p37
      %p39 = scmp.ne.s32.totalorder %s25, %s26
      %p40 = scmp.eq.s32.totalorder %s18, 3
      %p41 = por %p39, %p40
      %p43 = scmp.ne.s32.totalorder %s26, %s42
      %p44 = scmp.eq.s32.totalorder %s18, 0
      %p45 = por %p43, %p44
      %s47 = sadd.s32 %s46, 1
      %p50 = scmp.eq.s32.totalorder %s12, 3
      %p51 = scmp.ne.s32.totalorder %s46, %s48
      %p52 = scmp.eq.s32.totalorder %s12, 0
      %p53 = por %p51, %p52
      %p54 = scmp.ne.s32.totalorder %s46, %s48
      %p55 = scmp.eq.s32.totalorder %s17, 3
      %p56 = por %p54, %p55
      %p57 = scmp.ne.s32.totalorder %s48, %s49
      %p58 = scmp.eq.s32.totalorder %s17, 0
      %p59 = por %p57, %p58
      %p60 = scmp.ne.s32.totalorder %s48, %s49
      %p61 = scmp.eq.s32.totalorder %s18, 3
      %p62 = por %p60, %p61
      %p64 = scmp.ne.s32.totalorder %s49, %s63
      %p65 = scmp.eq.s32.totalorder %s18, 0
      %p66 = por %p64, %p65
      %s67 = ssub.s32 %s12, %s19
      %p68 = scmp.eq.s32.totalorder %s67, 0
      %s70 = sadd.s32 %s69, 1
      %s71 = scalar_select %p68, %s69, %s70
      %p74 = pneg %p68
      %p75 = scmp.eq.s32.totalorder %s12, 3
      %p76 = por %p74, %p75
      %p77 = scmp.ne.s32.totalorder %s69, %s72
      %p78 = scmp.eq.s32.totalorder %s12, 0
      %p79 = por %p77, %p78
      %p80 = scmp.ne.s32.totalorder %s69, %s72
      %p81 = scmp.eq.s32.totalorder %s17, 3
      %p82 = por %p80, %p81
      %p83 = scmp.ne.s32.totalorder %s72, %s73
      %p84 = scmp.eq.s32.totalorder %s17, 0
      %p85 = por %p83, %p84
      %p86 = scmp.ne.s32.totalorder %s72, %s73
      %p87 = scmp.eq.s32.totalorder %s18, 3
      %p88 = por %p86, %p87
      %p90 = scmp.ne.s32.totalorder %s73, %s89
      %p91 = scmp.eq.s32.totalorder %s18, 0
      %p92 = por %p90, %p91
      %p93 = scmp.le.s32.totalorder 1, %s12
      %p94 = scmp.lt.s32.totalorder %s12, 5
      %p95 = pnand %p93, %p94
      %p96 = pneg %p95
      // Predicated region
      $region9: #{tpu_custom_call.1} parent=5 // pred_check
        _
      $region10: #{tpu_custom_call.1} parent=5 // pred_check_branch
        %98 = sbr.rel (%p95) target = $region12
      $region11: #{tpu_custom_call.1} parent=5 // pred_region
        %s99 = ssub.s32 %s12, 1
        // Predicated region
        $region13: #{tpu_custom_call.1} parent=11 // pred_check
          %p100 = pneg %p59
        $region14: #{tpu_custom_call.1} parent=11 // pred_check_branch
          %102 = sbr.rel (%p100) target = $region16
        $region15: #{tpu_custom_call.1} parent=11 // pred_region
          %s104 = ssub.s32 8704, 8704
          %105 = vsyncadd [#allocation3], %s104
          %s106 = sshll.u32 [#allocation2], 4
          %s107 = int_to_ptr.vmem [resolvable:$true] %s106
          %112 = dma.hbm_to_vmem [thread:$0]  %s1, 8704, %s107, [#allocation3], 64, 64, 4
        $region16: #{tpu_custom_call.1} parent=11 // pred_fallthru
          _
      $region12: #{tpu_custom_call.1} parent=5 // pred_fallthru
        _
      %p113 = scmp.lt.s32.totalorder %s12, 4
      // Predicated region
      $region17: #{tpu_custom_call.1} parent=5 // pred_check
        %p114 = pneg %p113
      $region18: #{tpu_custom_call.1} parent=5 // pred_check_branch
        %116 = sbr.rel (%p114) target = $region20
      $region19: #{tpu_custom_call.1} parent=5 // pred_region
        // Predicated region
        $region21: #{tpu_custom_call.1} parent=19 // pred_check
          %p117 = pneg %p32
        $region22: #{tpu_custom_call.1} parent=19 // pred_check_branch
          %119 = sbr.rel (%p117) target = $region24
        $region23: #{tpu_custom_call.1} parent=19 // pred_region
          %p120 = scmp.lt.s32.totalorder %s12, 3
          %s121 = scalar_select %p120, %s12, 3
          %s122 = smul.addr %s121, 8
          %s123 = smul.addr %s122, 4
          %s124 = scalar_lea.vmem %s0, %s123
        $region24: #{tpu_custom_call.1} parent=19 // pred_fallthru
          _
      $region20: #{tpu_custom_call.1} parent=5 // pred_fallthru
        _
      %p125 = scmp.le.s32.totalorder 1, %s12
      %p126 = scmp.lt.s32.totalorder %s12, 5
      %p127 = pnand %p125, %p126
      %p128 = pneg %p127
      // Predicated region
      $region25: #{tpu_custom_call.1} parent=5 // pred_check
        _
      $region26: #{tpu_custom_call.1} parent=5 // pred_check_branch
        %130 = sbr.rel (%p127) target = $region28
      $region27: #{tpu_custom_call.1} parent=5 // pred_region
        %s131 = ssub.s32 %s12, 1
        // Predicated region
        $region29: #{tpu_custom_call.1} parent=27 // pred_check
          %p132 = pneg %p59
        $region30: #{tpu_custom_call.1} parent=27 // pred_check_branch
          %134 = sbr.rel (%p132) target = $region32
        $region31: #{tpu_custom_call.1} parent=27 // pred_region
          %135 = dma.done [#allocation3], 8704
        $region32: #{tpu_custom_call.1} parent=27 // pred_fallthru
          _
        %p136 = scmp.lt.s32.totalorder %s17, 3
        %s137 = scalar_select %p136, %s17, 3
        %s138 = smul.addr %s137, 8
        %s139 = smul.addr %s138, 4
        %s140 = scalar_lea.vmem %s0, %s139
        %p141 = pneg %p38
        %p142 = pneg %p35
        %p143 = pneg %p59
        %p144 = pneg %p56
        %p145 = pneg %p85
        %p146 = pneg %p82
        %s147 = sand.u32 %s72, 1
        %s148 = scalar_lea.sflag [#allocation4], %s147
        %s149 = sand.u32 %s72, 1
        %s150 = smul.addr %s149, 8
        %s151 = scalar_lea.vmem [#allocation5], %s150
        %p152 = scmp.lt.s32.totalorder %s17, 3
        %s153 = scalar_select %p152, %s17, 3
        %s154 = smul.addr %s153, 8
        %s155 = smul.addr %s154, 4
        %s156 = scalar_lea.vmem %s0, %s155
        %v157 = vld [vmem:[%s156] sm:$0xf]
        %v158 = vld [vmem:[%s156 + $0x4] sm:$0xf]
        %v159 = vunpack.c.l.bf16 %v157
        %v160 = vunpack.c.l.bf16 %v158
        %v161 = vld [vmem:[%s156 + $0x8] sm:$0xf]
        %v162 = vld [vmem:[%s156 + $0xc] sm:$0xf]
        %v163 = vunpack.c.l.bf16 %v161
        %v164 = vunpack.c.l.bf16 %v162
        %v165 = vld [vmem:[%s156 + $0x10] sm:$0xf]
        %v166 = vunpack.c.l.bf16 %v165
        %v167 = vld [vmem:[%s156 + $0x18] sm:$0xf]
        %v168 = vld [vmem:[%s156 + $0x1c] sm:$0xf]
        %v169 = vunpack.c.l.bf16 %v167
        %v170 = vunpack.c.l.bf16 %v168
        %v171 = vld [vmem:[#allocation2] sm:$0xf]
        %v172 = vld [vmem:[#allocation2 + $0x4] sm:$0xf]
        %v173 = vunpack.c.l.bf16 %v171
        %v174 = vunpack.c.l.bf16 %v172
        %v175 = vld [vmem:[#allocation2 + $0x8] sm:$0xf]
        %v176 = vld [vmem:[#allocation2 + $0xc] sm:$0xf]
        %v177 = vunpack.c.l.bf16 %v175
        %v178 = vunpack.c.l.bf16 %v176
        %v179 = vld [vmem:[#allocation2 + $0x10] sm:$0xf]
        %v180 = vld [vmem:[#allocation2 + $0x14] sm:$0xf]
        %v181 = vld [vmem:[#allocation2 + $0x18] sm:$0xf]
        %v182 = vld [vmem:[#allocation2 + $0x1c] sm:$0xf]
        %v183 = vld [vmem:[#allocation2 + $0x20] sm:$0xf]
        %v184 = vld [vmem:[#allocation2 + $0x24] sm:$0xf]
        %v185 = vld [vmem:[#allocation2 + $0x28] sm:$0xf]
        %v186 = vld [vmem:[#allocation2 + $0x2c] sm:$0xf]
        %v187 = vld [vmem:[#allocation2 + $0x30] sm:$0xf]
        %v188 = vld [vmem:[#allocation2 + $0x34] sm:$0xf]
        %v189 = vld [vmem:[#allocation2 + $0x38] sm:$0xf]
        %v190 = vld [vmem:[#allocation2 + $0x3c] sm:$0xf]
        %v191 = vld [vmem:[#allocation2 + $0x40] sm:$0xf]
        %v192 = vld [vmem:[#allocation2 + $0x44] sm:$0xf]
        %v193 = vld [vmem:[#allocation2 + $0x48] sm:$0xf]
        %v194 = vld [vmem:[#allocation2 + $0x4c] sm:$0xf]
        %v195 = vunpack.c.l.bf16 %v179
        %v196 = vunpack.c.l.bf16 %v180
        %v197 = vunpack.c.l.bf16 %v181
        %v198 = vunpack.c.l.bf16 %v182
        %v199 = vunpack.c.l.bf16 %v183
        %v200 = vunpack.c.l.bf16 %v184
        %v201 = vunpack.c.l.bf16 %v185
        %v202 = vunpack.c.l.bf16 %v186
        %v203 = vunpack.c.l.bf16 %v187
        %v204 = vunpack.c.l.bf16 %v188
        %v205 = vunpack.c.l.bf16 %v189
        %v206 = vunpack.c.l.bf16 %v190
        %v207 = vunpack.c.l.bf16 %v191
        %v208 = vunpack.c.l.bf16 %v192
        %v209 = vunpack.c.l.bf16 %v193
        %v210 = vunpack.c.l.bf16 %v194
        %v211 = vld [vmem:[#allocation2 + $0x50] sm:$0xf]
        %v212 = vld [vmem:[#allocation2 + $0x54] sm:$0xf]
        %v213 = vld [vmem:[#allocation2 + $0x58] sm:$0xf]
        %v214 = vld [vmem:[#allocation2 + $0x5c] sm:$0xf]
        %v215 = vld [vmem:[#allocation2 + $0x60] sm:$0xf]
        %v216 = vld [vmem:[#allocation2 + $0x64] sm:$0xf]
        %v217 = vld [vmem:[#allocation2 + $0x68] sm:$0xf]
        %v218 = vld [vmem:[#allocation2 + $0x6c] sm:$0xf]
        %v219 = vld [vmem:[#allocation2 + $0x70] sm:$0xf]
        %v220 = vld [vmem:[#allocation2 + $0x74] sm:$0xf]
        %v221 = vld [vmem:[#allocation2 + $0x78] sm:$0xf]
        %v222 = vld [vmem:[#allocation2 + $0x7c] sm:$0xf]
        %v223 = vld [vmem:[#allocation2 + $0x80] sm:$0xf]
        %v224 = vld [vmem:[#allocation2 + $0x84] sm:$0xf]
        %v225 = vld [vmem:[#allocation2 + $0x88] sm:$0xf]
        %v226 = vld [vmem:[#allocation2 + $0x8c] sm:$0xf]
        %v227 = vunpack.c.l.bf16 %v211
        %v228 = vunpack.c.l.bf16 %v212
        %v229 = vunpack.c.l.bf16 %v213
        %v230 = vunpack.c.l.bf16 %v214
        %v231 = vunpack.c.l.bf16 %v215
        %v232 = vunpack.c.l.bf16 %v216
        %v233 = vunpack.c.l.bf16 %v217
        %v234 = vunpack.c.l.bf16 %v218
        %v235 = vunpack.c.l.bf16 %v219
        %v236 = vunpack.c.l.bf16 %v220
        %v237 = vunpack.c.l.bf16 %v221
        %v238 = vunpack.c.l.bf16 %v222
        %v239 = vunpack.c.l.bf16 %v223
        %v240 = vunpack.c.l.bf16 %v224
        %v241 = vunpack.c.l.bf16 %v225
        %v242 = vunpack.c.l.bf16 %v226
        %v243 = vld [vmem:[#allocation2 + $0x90] sm:$0xf]
        %v244 = vld [vmem:[#allocation2 + $0x94] sm:$0xf]
        %v245 = vld [vmem:[#allocation2 + $0x98] sm:$0xf]
        %v246 = vld [vmem:[#allocation2 + $0x9c] sm:$0xf]
        %v247 = vld [vmem:[#allocation2 + $0xa0] sm:$0xf]
        %v248 = vld [vmem:[#allocation2 + $0xa4] sm:$0xf]
        %v249 = vld [vmem:[#allocation2 + $0xa8] sm:$0xf]
        %v250 = vld [vmem:[#allocation2 + $0xac] sm:$0xf]
        %v251 = vld [vmem:[#allocation2 + $0xb0] sm:$0xf]
        %v252 = vld [vmem:[#allocation2 + $0xb4] sm:$0xf]
        %v253 = vld [vmem:[#allocation2 + $0xb8] sm:$0xf]
        %v254 = vld [vmem:[#allocation2 + $0xbc] sm:$0xf]
        %v255 = vld [vmem:[#allocation2 + $0xc0] sm:$0xf]
        %v256 = vld [vmem:[#allocation2 + $0xc4] sm:$0xf]
        %v257 = vld [vmem:[#allocation2 + $0xc8] sm:$0xf]
        %v258 = vld [vmem:[#allocation2 + $0xcc] sm:$0xf]
        %v259 = vunpack.c.l.bf16 %v243
        %v260 = vunpack.c.l.bf16 %v244
        %v261 = vunpack.c.l.bf16 %v245
        %v262 = vunpack.c.l.bf16 %v246
        %v263 = vunpack.c.l.bf16 %v247
        %v264 = vunpack.c.l.bf16 %v248
        %v265 = vunpack.c.l.bf16 %v249
        %v266 = vunpack.c.l.bf16 %v250
        %v267 = vunpack.c.l.bf16 %v251
        %v268 = vunpack.c.l.bf16 %v252
        %v269 = vunpack.c.l.bf16 %v253
        %v270 = vunpack.c.l.bf16 %v254
        %v271 = vunpack.c.l.bf16 %v255
        %v272 = vunpack.c.l.bf16 %v256
        %v273 = vunpack.c.l.bf16 %v257
        %v274 = vunpack.c.l.bf16 %v258
        %v275 = vld [vmem:[#allocation2 + $0xd0] sm:$0xf]
        %v276 = vld [vmem:[#allocation2 + $0xd4] sm:$0xf]
        %v277 = vld [vmem:[#allocation2 + $0xd8] sm:$0xf]
        %v278 = vld [vmem:[#allocation2 + $0xdc] sm:$0xf]
        %v279 = vld [vmem:[#allocation2 + $0xe0] sm:$0xf]
        %v280 = vld [vmem:[#allocation2 + $0xe4] sm:$0xf]
        %v281 = vld [vmem:[#allocation2 + $0xe8] sm:$0xf]
        %v282 = vld [vmem:[#allocation2 + $0xec] sm:$0xf]
        %v283 = vld [vmem:[#allocation2 + $0xf0] sm:$0xf]
        %v284 = vld [vmem:[#allocation2 + $0xf4] sm:$0xf]
        %v285 = vld [vmem:[#allocation2 + $0xf8] sm:$0xf]
        %v286 = vld [vmem:[#allocation2 + $0xfc] sm:$0xf]
        %v287 = vld [vmem:[#allocation2 + $0x100] sm:$0xf]
        %v288 = vld [vmem:[#allocation2 + $0x104] sm:$0xf]
        %v289 = vld [vmem:[#allocation2 + $0x108] sm:$0xf]
        %v290 = vld [vmem:[#allocation2 + $0x10c] sm:$0xf]
        %v291 = vunpack.c.l.bf16 %v275
        %v292 = vunpack.c.l.bf16 %v276
        %v293 = vunpack.c.l.bf16 %v277
        %v294 = vunpack.c.l.bf16 %v278
        %v295 = vunpack.c.l.bf16 %v279
        %v296 = vunpack.c.l.bf16 %v280
        %v297 = vunpack.c.l.bf16 %v281
        %v298 = vunpack.c.l.bf16 %v282
        %v299 = vunpack.c.l.bf16 %v283
        %v300 = vunpack.c.l.bf16 %v284
        %v301 = vunpack.c.l.bf16 %v285
        %v302 = vunpack.c.l.bf16 %v286
        %v303 = vunpack.c.l.bf16 %v287
        %v304 = vunpack.c.l.bf16 %v288
        %v305 = vunpack.c.l.bf16 %v289
        %v306 = vunpack.c.l.bf16 %v290
        %v307 = vld [vmem:[#allocation2 + $0x110] sm:$0xf]
        %v308 = vld [vmem:[#allocation2 + $0x114] sm:$0xf]
        %v309 = vld [vmem:[#allocation2 + $0x118] sm:$0xf]
        %v310 = vld [vmem:[#allocation2 + $0x11c] sm:$0xf]
        %v311 = vld [vmem:[#allocation2 + $0x120] sm:$0xf]
        %v312 = vld [vmem:[#allocation2 + $0x124] sm:$0xf]
        %v313 = vld [vmem:[#allocation2 + $0x128] sm:$0xf]
        %v314 = vld [vmem:[#allocation2 + $0x12c] sm:$0xf]
        %v315 = vld [vmem:[#allocation2 + $0x130] sm:$0xf]
        %v316 = vld [vmem:[#allocation2 + $0x134] sm:$0xf]
        %v317 = vld [vmem:[#allocation2 + $0x138] sm:$0xf]
        %v318 = vld [vmem:[#allocation2 + $0x13c] sm:$0xf]
        %v319 = vld [vmem:[#allocation2 + $0x140] sm:$0xf]
        %v320 = vld [vmem:[#allocation2 + $0x144] sm:$0xf]
        %v321 = vld [vmem:[#allocation2 + $0x148] sm:$0xf]
        %v322 = vld [vmem:[#allocation2 + $0x14c] sm:$0xf]
        %v323 = vunpack.c.l.bf16 %v307
        %v324 = vunpack.c.l.bf16 %v308
        %v325 = vunpack.c.l.bf16 %v309
        %v326 = vunpack.c.l.bf16 %v310
        %v327 = vunpack.c.l.bf16 %v311
        %v328 = vunpack.c.l.bf16 %v312
        %v329 = vunpack.c.l.bf16 %v313
        %v330 = vunpack.c.l.bf16 %v314
        %v331 = vunpack.c.l.bf16 %v315
        %v332 = vunpack.c.l.bf16 %v316
        %v333 = vunpack.c.l.bf16 %v317
        %v334 = vunpack.c.l.bf16 %v318
        %v335 = vunpack.c.l.bf16 %v319
        %v336 = vunpack.c.l.bf16 %v320
        %v337 = vunpack.c.l.bf16 %v321
        %v338 = vunpack.c.l.bf16 %v322
        %v339 = vld [vmem:[#allocation2 + $0x150] sm:$0xf]
        %v340 = vld [vmem:[#allocation2 + $0x154] sm:$0xf]
        %v341 = vld [vmem:[#allocation2 + $0x158] sm:$0xf]
        %v342 = vld [vmem:[#allocation2 + $0x15c] sm:$0xf]
        %v343 = vld [vmem:[#allocation2 + $0x160] sm:$0xf]
        %v344 = vld [vmem:[#allocation2 + $0x164] sm:$0xf]
        %v345 = vld [vmem:[#allocation2 + $0x168] sm:$0xf]
        %v346 = vld [vmem:[#allocation2 + $0x16c] sm:$0xf]
        %v347 = vld [vmem:[#allocation2 + $0x170] sm:$0xf]
        %v348 = vld [vmem:[#allocation2 + $0x174] sm:$0xf]
        %v349 = vld [vmem:[#allocation2 + $0x178] sm:$0xf]
        %v350 = vld [vmem:[#allocation2 + $0x17c] sm:$0xf]
        %v351 = vld [vmem:[#allocation2 + $0x180] sm:$0xf]
        %v352 = vld [vmem:[#allocation2 + $0x184] sm:$0xf]
        %v353 = vld [vmem:[#allocation2 + $0x188] sm:$0xf]
        %v354 = vld [vmem:[#allocation2 + $0x18c] sm:$0xf]
        %v355 = vunpack.c.l.bf16 %v339
        %v356 = vunpack.c.l.bf16 %v340
        %v357 = vunpack.c.l.bf16 %v341
        %v358 = vunpack.c.l.bf16 %v342
        %v359 = vunpack.c.l.bf16 %v343
        %v360 = vunpack.c.l.bf16 %v344
        %v361 = vunpack.c.l.bf16 %v345
        %v362 = vunpack.c.l.bf16 %v346
        %v363 = vunpack.c.l.bf16 %v347
        %v364 = vunpack.c.l.bf16 %v348
        %v365 = vunpack.c.l.bf16 %v349
        %v366 = vunpack.c.l.bf16 %v350
        %v367 = vunpack.c.l.bf16 %v351
        %v368 = vunpack.c.l.bf16 %v352
        %v369 = vunpack.c.l.bf16 %v353
        %v370 = vunpack.c.l.bf16 %v354
        %v371 = vld [vmem:[#allocation2 + $0x198] sm:$0xf]
        %v372 = vld [vmem:[#allocation2 + $0x19c] sm:$0xf]
        %v373 = vld [vmem:[#allocation2 + $0x1a0] sm:$0xf]
        %v374 = vld [vmem:[#allocation2 + $0x1a4] sm:$0xf]
        %v375 = vld [vmem:[#allocation2 + $0x1a8] sm:$0xf]
        %v376 = vld [vmem:[#allocation2 + $0x1ac] sm:$0xf]
        %v377 = vld [vmem:[#allocation2 + $0x1b0] sm:$0xf]
        %v378 = vld [vmem:[#allocation2 + $0x1b4] sm:$0xf]
        %v379 = vld [vmem:[#allocation2 + $0x1b8] sm:$0xf]
        %v380 = vld [vmem:[#allocation2 + $0x1bc] sm:$0xf]
        %v381 = vld [vmem:[#allocation2 + $0x1c0] sm:$0xf]
        %v382 = vld [vmem:[#allocation2 + $0x1c4] sm:$0xf]
        %v383 = vld [vmem:[#allocation2 + $0x1c8] sm:$0xf]
        %v384 = vld [vmem:[#allocation2 + $0x1cc] sm:$0xf]
        %v385 = vld [vmem:[#allocation2 + $0x1d0] sm:$0xf]
        %v386 = vld [vmem:[#allocation2 + $0x1d4] sm:$0xf]
        %v387 = vunpack.c.l.bf16 %v371
        %v388 = vunpack.c.l.bf16 %v372
        %v389 = vunpack.c.l.bf16 %v373
        %v390 = vunpack.c.l.bf16 %v374
        %v391 = vunpack.c.l.bf16 %v375
        %v392 = vunpack.c.l.bf16 %v376
        %v393 = vunpack.c.l.bf16 %v377
        %v394 = vunpack.c.l.bf16 %v378
        %v395 = vunpack.c.l.bf16 %v379
        %v396 = vunpack.c.l.bf16 %v380
        %v397 = vunpack.c.l.bf16 %v381
        %v398 = vunpack.c.l.bf16 %v382
        %v399 = vunpack.c.l.bf16 %v383
        %v400 = vunpack.c.l.bf16 %v384
        %v401 = vunpack.c.l.bf16 %v385
        %v402 = vunpack.c.l.bf16 %v386
        %v403 = vld [vmem:[#allocation2 + $0x1d8] sm:$0xf]
        %v404 = vld [vmem:[#allocation2 + $0x1dc] sm:$0xf]
        %v405 = vld [vmem:[#allocation2 + $0x1e0] sm:$0xf]
        %v406 = vld [vmem:[#allocation2 + $0x1e4] sm:$0xf]
        %v407 = vld [vmem:[#allocation2 + $0x1e8] sm:$0xf]
        %v408 = vld [vmem:[#allocation2 + $0x1ec] sm:$0xf]
        %v409 = vld [vmem:[#allocation2 + $0x1f0] sm:$0xf]
        %v410 = vld [vmem:[#allocation2 + $0x1f4] sm:$0xf]
        %v411 = vld [vmem:[#allocation2 + $0x1f8] sm:$0xf]
        %v412 = vld [vmem:[#allocation2 + $0x1fc] sm:$0xf]
        %v413 = vld [vmem:[#allocation2 + $0x200] sm:$0xf]
        %v414 = vld [vmem:[#allocation2 + $0x204] sm:$0xf]
        %v415 = vld [vmem:[#allocation2 + $0x208] sm:$0xf]
        %v416 = vld [vmem:[#allocation2 + $0x20c] sm:$0xf]
        %v417 = vld [vmem:[#allocation2 + $0x210] sm:$0xf]
        %v418 = vld [vmem:[#allocation2 + $0x214] sm:$0xf]
        %v419 = vunpack.c.l.bf16 %v403
        %v420 = vunpack.c.l.bf16 %v404
        %v421 = vunpack.c.l.bf16 %v405
        %v422 = vunpack.c.l.bf16 %v406
        %v423 = vunpack.c.l.bf16 %v407
        %v424 = vunpack.c.l.bf16 %v408
        %v425 = vunpack.c.l.bf16 %v409
        %v426 = vunpack.c.l.bf16 %v410
        %v427 = vunpack.c.l.bf16 %v411
        %v428 = vunpack.c.l.bf16 %v412
        %v429 = vunpack.c.l.bf16 %v413
        %v430 = vunpack.c.l.bf16 %v414
        %v431 = vunpack.c.l.bf16 %v415
        %v432 = vunpack.c.l.bf16 %v416
        %v433 = vunpack.c.l.bf16 %v417
        %v434 = vunpack.c.l.bf16 %v418
        %v435 = vld [vmem:[#allocation2 + $0x190] sm:$0x3]
        %v436 = vunpack.c.l.bf16 %v435
        %v437 = vld [vmem:[#allocation2 + $0x218] sm:$0x1]
        %v438 = vunpack.c.l.bf16 %v437
        %vm439 = vcmask 130048
        %v441 = vsel %vm439, %v159, 0
        %v444 = vsel %vm439, %v160, 0
        %446 = vmatprep.subr.mxu0 0.0
        %447 = vmatpush1.msra.mxu0 %v163
        %448 = vmatprep.subr.mxu0 0.0
        %449 = vmatpush1.msra.mxu0 %v164
        %450 = vmatprep.subr.mxu0 0.0
        %451 = vmatpush1.msra.mxu0 0.0
        %452 = vmatprep.subr.mxu0 0.0
        %453 = vmatpush1.msra.mxu0 0.0
        %454 = vmatprep.subr.mxu0 0.0
        %455 = vmatpush1.msra.mxu0 0.0
        %456 = vmatprep.subr.mxu0 0.0
        %457 = vmatpush1.msra.mxu0 0.0
        %458 = vmatprep.subr.mxu0 0.0
        %459 = vmatpush1.msra.mxu0 0.0
        %460 = vmatprep.subr.mxu0 0.0
        %461 = vmatpush1.msra.mxu0 0.0
        %462 = vmatprep.subr.mxu0 0.0
        %463 = vmatpush1.msra.mxu0 0.0
        %464 = vmatprep.subr.mxu0 0.0
        %465 = vmatpush1.msra.mxu0 0.0
        %466 = vmatprep.subr.mxu0 0.0
        %467 = vmatpush1.msra.mxu0 0.0
        %468 = vmatprep.subr.mxu0 0.0
        %469 = vmatpush1.msra.mxu0 0.0
        %470 = vmatprep.subr.mxu0 0.0
        %471 = vmatpush1.msra.mxu0 0.0
        %472 = vmatprep.subr.mxu0 0.0
        %473 = vmatpush1.msra.mxu0 0.0
        %474 = vmatprep.subr.mxu0 0.0
        %475 = vmatpush1.msra.mxu0 0.0
        %476 = vmatprep.subr.mxu0 0.0
        %477 = vmatpush1.msra.mxu0 0.0
        %478 = vmatprep.subr.mxu0 0.0
        %479 = vmatpush1.msra.mxu0 0.0
        %480 = vmatprep.subr.mxu0 0.0
        %481 = vmatpush1.msra.mxu0 0.0
        %482 = vmatprep.subr.mxu0 0.0
        %483 = vmatpush1.msra.mxu0 0.0
        %484 = vmatprep.subr.mxu0 0.0
        %485 = vmatpush1.msra.mxu0 0.0
        %486 = vmatprep.subr.mxu0 0.0
        %487 = vmatpush1.msra.mxu0 0.0
        %488 = vmatprep.subr.mxu0 0.0
        %489 = vmatpush1.msra.mxu0 0.0
        %490 = vmatprep.subr.mxu0 0.0
        %491 = vmatpush1.msra.mxu0 0.0
        %492 = vmatprep.subr.mxu0 0.0
        %493 = vmatpush1.msra.mxu0 0.0
        %494 = vmatprep.subr.mxu0 0.0
        %495 = vmatpush1.msra.mxu0 0.0
        %496 = vmatprep.subr.mxu0 0.0
        %497 = vmatpush1.msra.mxu0 0.0
        %498 = vmatprep.subr.mxu0 0.0
        %499 = vmatpush1.msra.mxu0 0.0
        %500 = vmatprep.subr.mxu0 0.0
        %501 = vmatpush1.msra.mxu0 0.0
        %502 = vmatprep.subr.mxu0 0.0
        %503 = vmatpush1.msra.mxu0 0.0
        %504 = vmatprep.subr.mxu0 0.0
        %505 = vmatpush1.msra.mxu0 0.0
        %506 = vmatprep.subr.mxu0 0.0
        %507 = vmatpush1.msra.mxu0 0.0
        %508 = vmatprep.subr.mxu0 0.0
        %509 = vmatpush1.msra.mxu0 0.0
        %510 = vmatprep.mubr.f32.mxu0 0.0
        %511 = vmatmul.mubr.f32.gmra.mrb[0].mxu0 %v441
        %v512 = vpop.f32.mrb[0].mxu0
        %v513 = vadd.f32 0.0, %v512
        %v514 = vpop.f32.mrb[0].mxu0
        %515 = vmatprep.mubr.f32.mxu0 0.0
        %516 = vmatmul.mubr.f32.gmra.mrb[0].mxu0 %v444
        %v517 = vpop.f32.mrb[0].mxu0
        %v518 = vadd.f32 0.0, %v517
        %v519 = vpop.f32.mrb[0].mxu0
        %520 = vdwg.mxu0
        %v522 = vsel %vm439, %v513, 0
        %v525 = vsel %vm439, %v518, 0
        %527 = vmatprep.subr.mxu0 0.0
        %528 = vmatpush1.msra.mxu0 %v177
        %529 = vmatprep.subr.mxu0 0.0
        %530 = vmatpush1.msra.mxu0 %v178
        %531 = vmatprep.subr.mxu0 0.0
        %532 = vmatpush1.msra.mxu0 0.0
        %533 = vmatprep.subr.mxu0 0.0
        %534 = vmatpush1.msra.mxu0 0.0
        %535 = vmatprep.subr.mxu0 0.0
        %536 = vmatpush1.msra.mxu0 0.0
        %537 = vmatprep.subr.mxu0 0.0
        %538 = vmatpush1.msra.mxu0 0.0
        %539 = vmatprep.subr.mxu0 0.0
        %540 = vmatpush1.msra.mxu0 0.0
        %541 = vmatprep.subr.mxu0 0.0
        %542 = vmatpush1.msra.mxu0 0.0
        %543 = vmatprep.subr.mxu0 0.0
        %544 = vmatpush1.msra.mxu0 0.0
        %545 = vmatprep.subr.mxu0 0.0
        %546 = vmatpush1.msra.mxu0 0.0
        %547 = vmatprep.subr.mxu0 0.0
        %548 = vmatpush1.msra.mxu0 0.0
        %549 = vmatprep.subr.mxu0 0.0
        %550 = vmatpush1.msra.mxu0 0.0
        %551 = vmatprep.subr.mxu0 0.0
        %552 = vmatpush1.msra.mxu0 0.0
        %553 = vmatprep.subr.mxu0 0.0
        %554 = vmatpush1.msra.mxu0 0.0
        %555 = vmatprep.subr.mxu0 0.0
        %556 = vmatpush1.msra.mxu0 0.0
        %557 = vmatprep.subr.mxu0 0.0
        %558 = vmatpush1.msra.mxu0 0.0
        %559 = vmatprep.subr.mxu0 0.0
        %560 = vmatpush1.msra.mxu0 0.0
        %561 = vmatprep.subr.mxu0 0.0
        %562 = vmatpush1.msra.mxu0 0.0
        %563 = vmatprep.subr.mxu0 0.0
        %564 = vmatpush1.msra.mxu0 0.0
        %565 = vmatprep.subr.mxu0 0.0
        %566 = vmatpush1.msra.mxu0 0.0
        %567 = vmatprep.subr.mxu0 0.0
        %568 = vmatpush1.msra.mxu0 0.0
        %569 = vmatprep.subr.mxu0 0.0
        %570 = vmatpush1.msra.mxu0 0.0
        %571 = vmatprep.subr.mxu0 0.0
        %572 = vmatpush1.msra.mxu0 0.0
        %573 = vmatprep.subr.mxu0 0.0
        %574 = vmatpush1.msra.mxu0 0.0
        %575 = vmatprep.subr.mxu0 0.0
        %576 = vmatpush1.msra.mxu0 0.0
        %577 = vmatprep.subr.mxu0 0.0
        %578 = vmatpush1.msra.mxu0 0.0
        %579 = vmatprep.subr.mxu0 0.0
        %580 = vmatpush1.msra.mxu0 0.0
        %581 = vmatprep.subr.mxu0 0.0
        %582 = vmatpush1.msra.mxu0 0.0
        %583 = vmatprep.subr.mxu0 0.0
        %584 = vmatpush1.msra.mxu0 0.0
        %585 = vmatprep.subr.mxu0 0.0
        %586 = vmatpush1.msra.mxu0 0.0
        %587 = vmatprep.subr.mxu0 0.0
        %588 = vmatpush1.msra.mxu0 0.0
        %589 = vmatprep.subr.mxu0 0.0
        %590 = vmatpush1.msra.mxu0 0.0
        %591 = vmatprep.mubr.f32.mxu0 0.0
        %592 = vmatmul.mubr.f32.gmra.mrb[0].mxu0 %v522
        %v593 = vpop.f32.mrb[0].mxu0
        %v594 = vadd.f32 0.0, %v593
        %v595 = vpop.f32.mrb[0].mxu0
        %596 = vmatprep.mubr.f32.mxu0 0.0
        %597 = vmatmul.mubr.f32.gmra.mrb[0].mxu0 %v525
        %v598 = vpop.f32.mrb[0].mxu0
        %v599 = vadd.f32 0.0, %v598
        %v600 = vpop.f32.mrb[0].mxu0
        %601 = vdwg.mxu0
        %v603 = vsel %vm439, %v163, 0
        %v606 = vsel %vm439, %v164, 0
        %608 = vmatprep.subr.mxu0 0.0
        %609 = vmatpush1.msra.mxu0 %v173
        %610 = vmatprep.subr.mxu0 0.0
        %611 = vmatpush1.msra.mxu0 %v174
        %612 = vmatprep.subr.mxu0 0.0
        %613 = vmatpush1.msra.mxu0 0.0
        %614 = vmatprep.subr.mxu0 0.0
        %615 = vmatpush1.msra.mxu0 0.0
        %616 = vmatprep.subr.mxu0 0.0
        %617 = vmatpush1.msra.mxu0 0.0
        %618 = vmatprep.subr.mxu0 0.0
        %619 = vmatpush1.msra.mxu0 0.0
        %620 = vmatprep.subr.mxu0 0.0
        %621 = vmatpush1.msra.mxu0 0.0
        %622 = vmatprep.subr.mxu0 0.0
        %623 = vmatpush1.msra.mxu0 0.0
        %624 = vmatprep.subr.mxu0 0.0
        %625 = vmatpush1.msra.mxu0 0.0
        %626 = vmatprep.subr.mxu0 0.0
        %627 = vmatpush1.msra.mxu0 0.0
        %628 = vmatprep.subr.mxu0 0.0
        %629 = vmatpush1.msra.mxu0 0.0
        %630 = vmatprep.subr.mxu0 0.0
        %631 = vmatpush1.msra.mxu0 0.0
        %632 = vmatprep.subr.mxu0 0.0
        %633 = vmatpush1.msra.mxu0 0.0
        %634 = vmatprep.subr.mxu0 0.0
        %635 = vmatpush1.msra.mxu0 0.0
        %636 = vmatprep.subr.mxu0 0.0
        %637 = vmatpush1.msra.mxu0 0.0
        %638 = vmatprep.subr.mxu0 0.0
        %639 = vmatpush1.msra.mxu0 0.0
        %640 = vmatprep.subr.mxu0 0.0
        %641 = vmatpush1.msra.mxu0 0.0
        %642 = vmatprep.subr.mxu0 0.0
        %643 = vmatpush1.msra.mxu0 0.0
        %644 = vmatprep.subr.mxu0 0.0
        %645 = vmatpush1.msra.mxu0 0.0
        %646 = vmatprep.subr.mxu0 0.0
        %647 = vmatpush1.msra.mxu0 0.0
        %648 = vmatprep.subr.mxu0 0.0
        %649 = vmatpush1.msra.mxu0 0.0
        %650 = vmatprep.subr.mxu0 0.0
        %651 = vmatpush1.msra.mxu0 0.0
        %652 = vmatprep.subr.mxu0 0.0
        %653 = vmatpush1.msra.mxu0 0.0
        %654 = vmatprep.subr.mxu0 0.0
        %655 = vmatpush1.msra.mxu0 0.0
        %656 = vmatprep.subr.mxu0 0.0
        %657 = vmatpush1.msra.mxu0 0.0
        %658 = vmatprep.subr.mxu0 0.0
        %659 = vmatpush1.msra.mxu0 0.0
        %660 = vmatprep.subr.mxu0 0.0
        %661 = vmatpush1.msra.mxu0 0.0
        %662 = vmatprep.subr.mxu0 0.0
        %663 = vmatpush1.msra.mxu0 0.0
        %664 = vmatprep.subr.mxu0 0.0
        %665 = vmatpush1.msra.mxu0 0.0
        %666 = vmatprep.subr.mxu0 0.0
        %667 = vmatpush1.msra.mxu0 0.0
        %668 = vmatprep.subr.mxu0 0.0
        %669 = vmatpush1.msra.mxu0 0.0
        %670 = vmatprep.subr.mxu0 0.0
        %671 = vmatpush1.msra.mxu0 0.0
        %672 = vmatprep.mubr.f32.mxu0 0.0
        %673 = vmatmul.mubr.f32.gmra.mrb[0].mxu0 %v603
        %v674 = vpop.f32.mrb[0].mxu0
        %v675 = vadd.f32 %v594, %v674
        %v676 = vpop.f32.mrb[0].mxu0
        %677 = vmatprep.mubr.f32.mxu0 0.0
        %678 = vmatmul.mubr.f32.gmra.mrb[0].mxu0 %v606
        %v679 = vpop.f32.mrb[0].mxu0
        %v680 = vadd.f32 %v599, %v679
        %v681 = vpop.f32.mrb[0].mxu0
        %682 = vdwg.mxu0
        %v683 = vlaneseq
        %v684 = vshrl.u32 %v683, 7
        %v685 = vsub.s32 0, %v684
        %v686 = vrot.slane %v436, %v685
        %v687 = vadd.f32 %v675, %v686
        %v688 = vadd.f32 %v680, %v686
        %v689 = vmax.f32 %v687, 0.0
        %v690 = vmax.f32 %v688, 0.0
        %691 = vmatprep.subr.mxu0 0.0
        %692 = vmatpush1.msra.mxu0 %v689
        %693 = vmatprep.subr.mxu0 0.0
        %694 = vmatpush1.msra.mxu0 %v690
        %695 = vmatprep.subr.mxu0 0.0
        %696 = vmatpush1.msra.mxu0 0.0
        %697 = vmatprep.subr.mxu0 0.0
        %698 = vmatpush1.msra.mxu0 0.0
        %699 = vmatprep.subr.mxu0 0.0
        %700 = vmatpush1.msra.mxu0 0.0
        %701 = vmatprep.subr.mxu0 0.0
        %702 = vmatpush1.msra.mxu0 0.0
        %703 = vmatprep.subr.mxu0 0.0
        %704 = vmatpush1.msra.mxu0 0.0
        %705 = vmatprep.subr.mxu0 0.0
        %706 = vmatpush1.msra.mxu0 0.0
        %707 = vmatprep.subr.mxu0 0.0
        %708 = vmatpush1.msra.mxu0 0.0
        %709 = vmatprep.subr.mxu0 0.0
        %710 = vmatpush1.msra.mxu0 0.0
        %711 = vmatprep.subr.mxu0 0.0
        %712 = vmatpush1.msra.mxu0 0.0
        %713 = vmatprep.subr.mxu0 0.0
        %714 = vmatpush1.msra.mxu0 0.0
        %715 = vmatprep.subr.mxu0 0.0
        %716 = vmatpush1.msra.mxu0 0.0
        %717 = vmatprep.subr.mxu0 0.0
        %718 = vmatpush1.msra.mxu0 0.0
        %719 = vmatprep.subr.mxu0 0.0
        %720 = vmatpush1.msra.mxu0 0.0
        %721 = vmatprep.subr.mxu0 0.0
        %722 = vmatpush1.msra.mxu0 0.0
        %723 = vmatprep.subr.mxu0 0.0
        %724 = vmatpush1.msra.mxu0 0.0
        %725 = vmatprep.subr.mxu0 0.0
        %726 = vmatpush1.msra.mxu0 0.0
        %727 = vmatprep.subr.mxu0 0.0
        %728 = vmatpush1.msra.mxu0 0.0
        %729 = vmatprep.subr.mxu0 0.0
        %730 = vmatpush1.msra.mxu0 0.0
        %731 = vmatprep.subr.mxu0 0.0
        %732 = vmatpush1.msra.mxu0 0.0
        %733 = vmatprep.subr.mxu0 0.0
        %734 = vmatpush1.msra.mxu0 0.0
        %735 = vmatprep.subr.mxu0 0.0
        %736 = vmatpush1.msra.mxu0 0.0
        %737 = vmatprep.subr.mxu0 0.0
        %738 = vmatpush1.msra.mxu0 0.0
        %739 = vmatprep.subr.mxu0 0.0
        %740 = vmatpush1.msra.mxu0 0.0
        %741 = vmatprep.subr.mxu0 0.0
        %742 = vmatpush1.msra.mxu0 0.0
        %743 = vmatprep.subr.mxu0 0.0
        %744 = vmatpush1.msra.mxu0 0.0
        %745 = vmatprep.subr.mxu0 0.0
        %746 = vmatpush1.msra.mxu0 0.0
        %747 = vmatprep.subr.mxu0 0.0
        %748 = vmatpush1.msra.mxu0 0.0
        %749 = vmatprep.subr.mxu0 0.0
        %750 = vmatpush1.msra.mxu0 0.0
        %751 = vmatprep.subr.mxu0 0.0
        %752 = vmatpush1.msra.mxu0 0.0
        %753 = vmatprep.subr.mxu0 0.0
        %754 = vmatpush1.msra.mxu0 0.0
        %755 = vmatprep.mubr.f32.mxu0 0.0
        %756 = vmatmul.mubr.f32.gmra.mrb[0].mxu0 %v441
        %v757 = vpop.f32.mrb[0].mxu0
        %v758 = vadd.f32 0.0, %v757
        %v759 = vpop.f32.mrb[0].mxu0
        %760 = vmatprep.mubr.f32.mxu0 0.0
        %761 = vmatmul.mubr.f32.gmra.mrb[0].mxu0 %v444
        %v762 = vpop.f32.mrb[0].mxu0
        %v763 = vadd.f32 0.0, %v762
        %v764 = vpop.f32.mrb[0].mxu0
        %765 = vdwg.mxu0
        %766 = vmatprep.subr.mxu0 0.0
        %767 = vmatpush1.msra.mxu0 %v227
        %768 = vmatprep.subr.mxu0 0.0
        %769 = vmatpush1.msra.mxu0 %v228
        %770 = vmatprep.subr.mxu0 0.0
        %771 = vmatpush1.msra.mxu0 %v229
        %772 = vmatprep.subr.mxu0 0.0
        %773 = vmatpush1.msra.mxu0 %v230
        %774 = vmatprep.subr.mxu0 0.0
        %775 = vmatpush1.msra.mxu0 %v231
        %776 = vmatprep.subr.mxu0 0.0
        %777 = vmatpush1.msra.mxu0 %v232
        %778 = vmatprep.subr.mxu0 0.0
        %779 = vmatpush1.msra.mxu0 %v233
        %780 = vmatprep.subr.mxu0 0.0
        %781 = vmatpush1.msra.mxu0 %v234
        %782 = vmatprep.subr.mxu0 0.0
        %783 = vmatpush1.msra.mxu0 %v235
        %784 = vmatprep.subr.mxu0 0.0
        %785 = vmatpush1.msra.mxu0 %v236
        %786 = vmatprep.subr.mxu0 0.0
        %787 = vmatpush1.msra.mxu0 %v237
        %788 = vmatprep.subr.mxu0 0.0
        %789 = vmatpush1.msra.mxu0 %v238
        %790 = vmatprep.subr.mxu0 0.0
        %791 = vmatpush1.msra.mxu0 %v239
        %792 = vmatprep.subr.mxu0 0.0
        %793 = vmatpush1.msra.mxu0 %v240
        %794 = vmatprep.subr.mxu0 0.0
        %795 = vmatpush1.msra.mxu0 %v241
        %796 = vmatprep.subr.mxu0 0.0
        %797 = vmatpush1.msra.mxu0 %v242
        %798 = vmatprep.subr.mxu0 0.0
        %799 = vmatpush1.msra.mxu0 0.0
        %800 = vmatprep.subr.mxu0 0.0
        %801 = vmatpush1.msra.mxu0 0.0
        %802 = vmatprep.subr.mxu0 0.0
        %803 = vmatpush1.msra.mxu0 0.0
        %804 = vmatprep.subr.mxu0 0.0
        %805 = vmatpush1.msra.mxu0 0.0
        %806 = vmatprep.subr.mxu0 0.0
        %807 = vmatpush1.msra.mxu0 0.0
        %808 = vmatprep.subr.mxu0 0.0
        %809 = vmatpush1.msra.mxu0 0.0
        %810 = vmatprep.subr.mxu0 0.0
        %811 = vmatpush1.msra.mxu0 0.0
        %812 = vmatprep.subr.mxu0 0.0
        %813 = vmatpush1.msra.mxu0 0.0
        %814 = vmatprep.subr.mxu0 0.0
        %815 = vmatpush1.msra.mxu0 0.0
        %816 = vmatprep.subr.mxu0 0.0
        %817 = vmatpush1.msra.mxu0 0.0
        %818 = vmatprep.subr.mxu0 0.0
        %819 = vmatpush1.msra.mxu0 0.0
        %820 = vmatprep.subr.mxu0 0.0
        %821 = vmatpush1.msra.mxu0 0.0
        %822 = vmatprep.subr.mxu0 0.0
        %823 = vmatpush1.msra.mxu0 0.0
        %824 = vmatprep.subr.mxu0 0.0
        %825 = vmatpush1.msra.mxu0 0.0
        %826 = vmatprep.subr.mxu0 0.0
        %827 = vmatpush1.msra.mxu0 0.0
        %828 = vmatprep.subr.mxu0 0.0
        %829 = vmatpush1.msra.mxu0 0.0
        %830 = vmatprep.mubr.f32.mxu0 0.0
        %831 = vmatmul.mubr.f32.gmra.mrb[0].mxu0 %v758
        %v832 = vpop.f32.mrb[0].mxu0
        %v833 = vadd.f32 0.0, %v832
        %v834 = vpop.f32.mrb[0].mxu0
        %835 = vmatprep.mubr.f32.mxu0 0.0
        %836 = vmatmul.mubr.f32.gmra.mrb[0].mxu0 %v763
        %v837 = vpop.f32.mrb[0].mxu0
        %v838 = vadd.f32 0.0, %v837
        %v839 = vpop.f32.mrb[0].mxu0
        %840 = vdwg.mxu0
        %841 = vmatprep.subr.mxu0 0.0
        %842 = vmatpush1.msra.mxu0 %v195
        %843 = vmatprep.subr.mxu0 0.0
        %844 = vmatpush1.msra.mxu0 %v196
        %845 = vmatprep.subr.mxu0 0.0
        %846 = vmatpush1.msra.mxu0 %v197
        %847 = vmatprep.subr.mxu0 0.0
        %848 = vmatpush1.msra.mxu0 %v198
        %849 = vmatprep.subr.mxu0 0.0
        %850 = vmatpush1.msra.mxu0 %v199
        %851 = vmatprep.subr.mxu0 0.0
        %852 = vmatpush1.msra.mxu0 %v200
        %853 = vmatprep.subr.mxu0 0.0
        %854 = vmatpush1.msra.mxu0 %v201
        %855 = vmatprep.subr.mxu0 0.0
        %856 = vmatpush1.msra.mxu0 %v202
        %857 = vmatprep.subr.mxu0 0.0
        %858 = vmatpush1.msra.mxu0 %v203
        %859 = vmatprep.subr.mxu0 0.0
        %860 = vmatpush1.msra.mxu0 %v204
        %861 = vmatprep.subr.mxu0 0.0
        %862 = vmatpush1.msra.mxu0 %v205
        %863 = vmatprep.subr.mxu0 0.0
        %864 = vmatpush1.msra.mxu0 %v206
        %865 = vmatprep.subr.mxu0 0.0
        %866 = vmatpush1.msra.mxu0 %v207
        %867 = vmatprep.subr.mxu0 0.0
        %868 = vmatpush1.msra.mxu0 %v208
        %869 = vmatprep.subr.mxu0 0.0
        %870 = vmatpush1.msra.mxu0 %v209
        %871 = vmatprep.subr.mxu0 0.0
        %872 = vmatpush1.msra.mxu0 %v210
        %873 = vmatprep.subr.mxu0 0.0
        %874 = vmatpush1.msra.mxu0 0.0
        %875 = vmatprep.subr.mxu0 0.0
        %876 = vmatpush1.msra.mxu0 0.0
        %877 = vmatprep.subr.mxu0 0.0
        %878 = vmatpush1.msra.mxu0 0.0
        %879 = vmatprep.subr.mxu0 0.0
        %880 = vmatpush1.msra.mxu0 0.0
        %881 = vmatprep.subr.mxu0 0.0
        %882 = vmatpush1.msra.mxu0 0.0
        %883 = vmatprep.subr.mxu0 0.0
        %884 = vmatpush1.msra.mxu0 0.0
        %885 = vmatprep.subr.mxu0 0.0
        %886 = vmatpush1.msra.mxu0 0.0
        %887 = vmatprep.subr.mxu0 0.0
        %888 = vmatpush1.msra.mxu0 0.0
        %889 = vmatprep.subr.mxu0 0.0
        %890 = vmatpush1.msra.mxu0 0.0
        %891 = vmatprep.subr.mxu0 0.0
        %892 = vmatpush1.msra.mxu0 0.0
        %893 = vmatprep.subr.mxu0 0.0
        %894 = vmatpush1.msra.mxu0 0.0
        %895 = vmatprep.subr.mxu0 0.0
        %896 = vmatpush1.msra.mxu0 0.0
        %897 = vmatprep.subr.mxu0 0.0
        %898 = vmatpush1.msra.mxu0 0.0
        %899 = vmatprep.subr.mxu0 0.0
        %900 = vmatpush1.msra.mxu0 0.0
        %901 = vmatprep.subr.mxu0 0.0
        %902 = vmatpush1.msra.mxu0 0.0
        %903 = vmatprep.subr.mxu0 0.0
        %904 = vmatpush1.msra.mxu0 0.0
        %905 = vmatprep.mubr.f32.mxu0 0.0
        %906 = vmatmul.mubr.f32.gmra.mrb[0].mxu0 %v689
        %v907 = vpop.f32.mrb[0].mxu0
        %v908 = vadd.f32 %v833, %v907
        %v909 = vpop.f32.mrb[0].mxu0
        %910 = vmatprep.mubr.f32.mxu0 0.0
        %911 = vmatmul.mubr.f32.gmra.mrb[0].mxu0 %v690
        %v912 = vpop.f32.mrb[0].mxu0
        %v913 = vadd.f32 %v838, %v912
        %v914 = vpop.f32.mrb[0].mxu0
        %915 = vdwg.mxu0
        %v916 = vlaneseq
        %v917 = vshrl.u32 %v916, 7
        %v918 = vsub.s32 1, %v917
        %v919 = vrot.slane %v436, %v918
        %v920 = vadd.f32 %v908, %v919
        %v921 = vadd.f32 %v913, %v919
        %v922 = vmax.f32 %v920, 0.0
        %v923 = vmax.f32 %v921, 0.0
        %924 = vmatprep.subr.mxu0 0.0
        %925 = vmatpush1.msra.mxu0 %v922
        %926 = vmatprep.subr.mxu0 0.0
        %927 = vmatpush1.msra.mxu0 %v923
        %928 = vmatprep.subr.mxu0 0.0
        %929 = vmatpush1.msra.mxu0 0.0
        %930 = vmatprep.subr.mxu0 0.0
        %931 = vmatpush1.msra.mxu0 0.0
        %932 = vmatprep.subr.mxu0 0.0
        %933 = vmatpush1.msra.mxu0 0.0
        %934 = vmatprep.subr.mxu0 0.0
        %935 = vmatpush1.msra.mxu0 0.0
        %936 = vmatprep.subr.mxu0 0.0
        %937 = vmatpush1.msra.mxu0 0.0
        %938 = vmatprep.subr.mxu0 0.0
        %939 = vmatpush1.msra.mxu0 0.0
        %940 = vmatprep.subr.mxu0 0.0
        %941 = vmatpush1.msra.mxu0 0.0
        %942 = vmatprep.subr.mxu0 0.0
        %943 = vmatpush1.msra.mxu0 0.0
        %944 = vmatprep.subr.mxu0 0.0
        %945 = vmatpush1.msra.mxu0 0.0
        %946 = vmatprep.subr.mxu0 0.0
        %947 = vmatpush1.msra.mxu0 0.0
        %948 = vmatprep.subr.mxu0 0.0
        %949 = vmatpush1.msra.mxu0 0.0
        %950 = vmatprep.subr.mxu0 0.0
        %951 = vmatpush1.msra.mxu0 0.0
        %952 = vmatprep.subr.mxu0 0.0
        %953 = vmatpush1.msra.mxu0 0.0
        %954 = vmatprep.subr.mxu0 0.0
        %955 = vmatpush1.msra.mxu0 0.0
        %956 = vmatprep.subr.mxu0 0.0
        %957 = vmatpush1.msra.mxu0 0.0
        %958 = vmatprep.subr.mxu0 0.0
        %959 = vmatpush1.msra.mxu0 0.0
        %960 = vmatprep.subr.mxu0 0.0
        %961 = vmatpush1.msra.mxu0 0.0
        %962 = vmatprep.subr.mxu0 0.0
        %963 = vmatpush1.msra.mxu0 0.0
        %964 = vmatprep.subr.mxu0 0.0
        %965 = vmatpush1.msra.mxu0 0.0
        %966 = vmatprep.subr.mxu0 0.0
        %967 = vmatpush1.msra.mxu0 0.0
        %968 = vmatprep.subr.mxu0 0.0
        %969 = vmatpush1.msra.mxu0 0.0
        %970 = vmatprep.subr.mxu0 0.0
        %971 = vmatpush1.msra.mxu0 0.0
        %972 = vmatprep.subr.mxu0 0.0
        %973 = vmatpush1.msra.mxu0 0.0
        %974 = vmatprep.subr.mxu0 0.0
        %975 = vmatpush1.msra.mxu0 0.0
        %976 = vmatprep.subr.mxu0 0.0
        %977 = vmatpush1.msra.mxu0 0.0
        %978 = vmatprep.subr.mxu0 0.0
        %979 = vmatpush1.msra.mxu0 0.0
        %980 = vmatprep.subr.mxu0 0.0
        %981 = vmatpush1.msra.mxu0 0.0
        %982 = vmatprep.subr.mxu0 0.0
        %983 = vmatpush1.msra.mxu0 0.0
        %984 = vmatprep.subr.mxu0 0.0
        %985 = vmatpush1.msra.mxu0 0.0
        %986 = vmatprep.subr.mxu0 0.0
        %987 = vmatpush1.msra.mxu0 0.0
        %988 = vmatprep.mubr.f32.mxu0 0.0
        %989 = vmatmul.mubr.f32.gmra.mrb[0].mxu0 %v441
        %v990 = vpop.f32.mrb[0].mxu0
        %v991 = vadd.f32 0.0, %v990
        %v992 = vpop.f32.mrb[0].mxu0
        %993 = vmatprep.mubr.f32.mxu0 0.0
        %994 = vmatmul.mubr.f32.gmra.mrb[0].mxu0 %v444
        %v995 = vpop.f32.mrb[0].mxu0
        %v996 = vadd.f32 0.0, %v995
        %v997 = vpop.f32.mrb[0].mxu0
        %998 = vdwg.mxu0
        %999 = vmatprep.subr.mxu0 0.0
        %1000 = vmatpush1.msra.mxu0 %v291
        %1001 = vmatprep.subr.mxu0 0.0
        %1002 = vmatpush1.msra.mxu0 %v292
        %1003 = vmatprep.subr.mxu0 0.0
        %1004 = vmatpush1.msra.mxu0 %v293
        %1005 = vmatprep.subr.mxu0 0.0
        %1006 = vmatpush1.msra.mxu0 %v294
        %1007 = vmatprep.subr.mxu0 0.0
        %1008 = vmatpush1.msra.mxu0 %v295
        %1009 = vmatprep.subr.mxu0 0.0
        %1010 = vmatpush1.msra.mxu0 %v296
        %1011 = vmatprep.subr.mxu0 0.0
        %1012 = vmatpush1.msra.mxu0 %v297
        %1013 = vmatprep.subr.mxu0 0.0
        %1014 = vmatpush1.msra.mxu0 %v298
        %1015 = vmatprep.subr.mxu0 0.0
        %1016 = vmatpush1.msra.mxu0 %v299
        %1017 = vmatprep.subr.mxu0 0.0
        %1018 = vmatpush1.msra.mxu0 %v300
        %1019 = vmatprep.subr.mxu0 0.0
        %1020 = vmatpush1.msra.mxu0 %v301
        %1021 = vmatprep.subr.mxu0 0.0
        %1022 = vmatpush1.msra.mxu0 %v302
        %1023 = vmatprep.subr.mxu0 0.0
        %1024 = vmatpush1.msra.mxu0 %v303
        %1025 = vmatprep.subr.mxu0 0.0
        %1026 = vmatpush1.msra.mxu0 %v304
        %1027 = vmatprep.subr.mxu0 0.0
        %1028 = vmatpush1.msra.mxu0 %v305
        %1029 = vmatprep.subr.mxu0 0.0
        %1030 = vmatpush1.msra.mxu0 %v306
        %1031 = vmatprep.subr.mxu0 0.0
        %1032 = vmatpush1.msra.mxu0 0.0
        %1033 = vmatprep.subr.mxu0 0.0
        %1034 = vmatpush1.msra.mxu0 0.0
        %1035 = vmatprep.subr.mxu0 0.0
        %1036 = vmatpush1.msra.mxu0 0.0
        %1037 = vmatprep.subr.mxu0 0.0
        %1038 = vmatpush1.msra.mxu0 0.0
        %1039 = vmatprep.subr.mxu0 0.0
        %1040 = vmatpush1.msra.mxu0 0.0
        %1041 = vmatprep.subr.mxu0 0.0
        %1042 = vmatpush1.msra.mxu0 0.0
        %1043 = vmatprep.subr.mxu0 0.0
        %1044 = vmatpush1.msra.mxu0 0.0
        %1045 = vmatprep.subr.mxu0 0.0
        %1046 = vmatpush1.msra.mxu0 0.0
        %1047 = vmatprep.subr.mxu0 0.0
        %1048 = vmatpush1.msra.mxu0 0.0
        %1049 = vmatprep.subr.mxu0 0.0
        %1050 = vmatpush1.msra.mxu0 0.0
        %1051 = vmatprep.subr.mxu0 0.0
        %1052 = vmatpush1.msra.mxu0 0.0
        %1053 = vmatprep.subr.mxu0 0.0
        %1054 = vmatpush1.msra.mxu0 0.0
        %1055 = vmatprep.subr.mxu0 0.0
        %1056 = vmatpush1.msra.mxu0 0.0
        %1057 = vmatprep.subr.mxu0 0.0
        %1058 = vmatpush1.msra.mxu0 0.0
        %1059 = vmatprep.subr.mxu0 0.0
        %1060 = vmatpush1.msra.mxu0 0.0
        %1061 = vmatprep.subr.mxu0 0.0
        %1062 = vmatpush1.msra.mxu0 0.0
        %1063 = vmatprep.mubr.f32.mxu0 0.0
        %1064 = vmatmul.mubr.f32.gmra.mrb[0].mxu0 %v991
        %v1065 = vpop.f32.mrb[0].mxu0
        %v1066 = vadd.f32 0.0, %v1065
        %v1067 = vpop.f32.mrb[0].mxu0
        %1068 = vmatprep.mubr.f32.mxu0 0.0
        %1069 = vmatmul.mubr.f32.gmra.mrb[0].mxu0 %v996
        %v1070 = vpop.f32.mrb[0].mxu0
        %v1071 = vadd.f32 0.0, %v1070
        %v1072 = vpop.f32.mrb[0].mxu0
        %1073 = vdwg.mxu0
        %1074 = vmatprep.subr.mxu0 0.0
        %1075 = vmatpush1.msra.mxu0 %v259
        %1076 = vmatprep.subr.mxu0 0.0
        %1077 = vmatpush1.msra.mxu0 %v260
        %1078 = vmatprep.subr.mxu0 0.0
        %1079 = vmatpush1.msra.mxu0 %v261
        %1080 = vmatprep.subr.mxu0 0.0
        %1081 = vmatpush1.msra.mxu0 %v262
        %1082 = vmatprep.subr.mxu0 0.0
        %1083 = vmatpush1.msra.mxu0 %v263
        %1084 = vmatprep.subr.mxu0 0.0
        %1085 = vmatpush1.msra.mxu0 %v264
        %1086 = vmatprep.subr.mxu0 0.0
        %1087 = vmatpush1.msra.mxu0 %v265
        %1088 = vmatprep.subr.mxu0 0.0
        %1089 = vmatpush1.msra.mxu0 %v266
        %1090 = vmatprep.subr.mxu0 0.0
        %1091 = vmatpush1.msra.mxu0 %v267
        %1092 = vmatprep.subr.mxu0 0.0
        %1093 = vmatpush1.msra.mxu0 %v268
        %1094 = vmatprep.subr.mxu0 0.0
        %1095 = vmatpush1.msra.mxu0 %v269
        %1096 = vmatprep.subr.mxu0 0.0
        %1097 = vmatpush1.msra.mxu0 %v270
        %1098 = vmatprep.subr.mxu0 0.0
        %1099 = vmatpush1.msra.mxu0 %v271
        %1100 = vmatprep.subr.mxu0 0.0
        %1101 = vmatpush1.msra.mxu0 %v272
        %1102 = vmatprep.subr.mxu0 0.0
        %1103 = vmatpush1.msra.mxu0 %v273
        %1104 = vmatprep.subr.mxu0 0.0
        %1105 = vmatpush1.msra.mxu0 %v274
        %1106 = vmatprep.subr.mxu0 0.0
        %1107 = vmatpush1.msra.mxu0 0.0
        %1108 = vmatprep.subr.mxu0 0.0
        %1109 = vmatpush1.msra.mxu0 0.0
        %1110 = vmatprep.subr.mxu0 0.0
        %1111 = vmatpush1.msra.mxu0 0.0
        %1112 = vmatprep.subr.mxu0 0.0
        %1113 = vmatpush1.msra.mxu0 0.0
        %1114 = vmatprep.subr.mxu0 0.0
        %1115 = vmatpush1.msra.mxu0 0.0
        %1116 = vmatprep.subr.mxu0 0.0
        %1117 = vmatpush1.msra.mxu0 0.0
        %1118 = vmatprep.subr.mxu0 0.0
        %1119 = vmatpush1.msra.mxu0 0.0
        %1120 = vmatprep.subr.mxu0 0.0
        %1121 = vmatpush1.msra.mxu0 0.0
        %1122 = vmatprep.subr.mxu0 0.0
        %1123 = vmatpush1.msra.mxu0 0.0
        %1124 = vmatprep.subr.mxu0 0.0
        %1125 = vmatpush1.msra.mxu0 0.0
        %1126 = vmatprep.subr.mxu0 0.0
        %1127 = vmatpush1.msra.mxu0 0.0
        %1128 = vmatprep.subr.mxu0 0.0
        %1129 = vmatpush1.msra.mxu0 0.0
        %1130 = vmatprep.subr.mxu0 0.0
        %1131 = vmatpush1.msra.mxu0 0.0
        %1132 = vmatprep.subr.mxu0 0.0
        %1133 = vmatpush1.msra.mxu0 0.0
        %1134 = vmatprep.subr.mxu0 0.0
        %1135 = vmatpush1.msra.mxu0 0.0
        %1136 = vmatprep.subr.mxu0 0.0
        %1137 = vmatpush1.msra.mxu0 0.0
        %1138 = vmatprep.mubr.f32.mxu0 0.0
        %1139 = vmatmul.mubr.f32.gmra.mrb[0].mxu0 %v922
        %v1140 = vpop.f32.mrb[0].mxu0
        %v1141 = vadd.f32 %v1066, %v1140
        %v1142 = vpop.f32.mrb[0].mxu0
        %1143 = vmatprep.mubr.f32.mxu0 0.0
        %1144 = vmatmul.mubr.f32.gmra.mrb[0].mxu0 %v923
        %v1145 = vpop.f32.mrb[0].mxu0
        %v1146 = vadd.f32 %v1071, %v1145
        %v1147 = vpop.f32.mrb[0].mxu0
        %1148 = vdwg.mxu0
        %v1149 = vlaneseq
        %v1150 = vshrl.u32 %v1149, 7
        %v1151 = vsub.s32 2, %v1150
        %v1152 = vrot.slane %v436, %v1151
        %v1153 = vadd.f32 %v1141, %v1152
        %v1154 = vadd.f32 %v1146, %v1152
        %v1155 = vmax.f32 %v1153, 0.0
        %v1156 = vmax.f32 %v1154, 0.0
        %v1157 = vadd.f32 %v1155, %v689
        %v1158 = vadd.f32 %v1156, %v690
        %1159 = vmatprep.subr.mxu0 0.0
        %1160 = vmatpush1.msra.mxu0 %v1157
        %1161 = vmatprep.subr.mxu0 0.0
        %1162 = vmatpush1.msra.mxu0 %v1158
        %1163 = vmatprep.subr.mxu0 0.0
        %1164 = vmatpush1.msra.mxu0 0.0
        %1165 = vmatprep.subr.mxu0 0.0
        %1166 = vmatpush1.msra.mxu0 0.0
        %1167 = vmatprep.subr.mxu0 0.0
        %1168 = vmatpush1.msra.mxu0 0.0
        %1169 = vmatprep.subr.mxu0 0.0
        %1170 = vmatpush1.msra.mxu0 0.0
        %1171 = vmatprep.subr.mxu0 0.0
        %1172 = vmatpush1.msra.mxu0 0.0
        %1173 = vmatprep.subr.mxu0 0.0
        %1174 = vmatpush1.msra.mxu0 0.0
        %1175 = vmatprep.subr.mxu0 0.0
        %1176 = vmatpush1.msra.mxu0 0.0
        %1177 = vmatprep.subr.mxu0 0.0
        %1178 = vmatpush1.msra.mxu0 0.0
        %1179 = vmatprep.subr.mxu0 0.0
        %1180 = vmatpush1.msra.mxu0 0.0
        %1181 = vmatprep.subr.mxu0 0.0
        %1182 = vmatpush1.msra.mxu0 0.0
        %1183 = vmatprep.subr.mxu0 0.0
        %1184 = vmatpush1.msra.mxu0 0.0
        %1185 = vmatprep.subr.mxu0 0.0
        %1186 = vmatpush1.msra.mxu0 0.0
        %1187 = vmatprep.subr.mxu0 0.0
        %1188 = vmatpush1.msra.mxu0 0.0
        %1189 = vmatprep.subr.mxu0 0.0
        %1190 = vmatpush1.msra.mxu0 0.0
        %1191 = vmatprep.subr.mxu0 0.0
        %1192 = vmatpush1.msra.mxu0 0.0
        %1193 = vmatprep.subr.mxu0 0.0
        %1194 = vmatpush1.msra.mxu0 0.0
        %1195 = vmatprep.subr.mxu0 0.0
        %1196 = vmatpush1.msra.mxu0 0.0
        %1197 = vmatprep.subr.mxu0 0.0
        %1198 = vmatpush1.msra.mxu0 0.0
        %1199 = vmatprep.subr.mxu0 0.0
        %1200 = vmatpush1.msra.mxu0 0.0
        %1201 = vmatprep.subr.mxu0 0.0
        %1202 = vmatpush1.msra.mxu0 0.0
        %1203 = vmatprep.subr.mxu0 0.0
        %1204 = vmatpush1.msra.mxu0 0.0
        %1205 = vmatprep.subr.mxu0 0.0
        %1206 = vmatpush1.msra.mxu0 0.0
        %1207 = vmatprep.subr.mxu0 0.0
        %1208 = vmatpush1.msra.mxu0 0.0
        %1209 = vmatprep.subr.mxu0 0.0
        %1210 = vmatpush1.msra.mxu0 0.0
        %1211 = vmatprep.subr.mxu0 0.0
        %1212 = vmatpush1.msra.mxu0 0.0
        %1213 = vmatprep.subr.mxu0 0.0
        %1214 = vmatpush1.msra.mxu0 0.0
        %1215 = vmatprep.subr.mxu0 0.0
        %1216 = vmatpush1.msra.mxu0 0.0
        %1217 = vmatprep.subr.mxu0 0.0
        %1218 = vmatpush1.msra.mxu0 0.0
        %1219 = vmatprep.subr.mxu0 0.0
        %1220 = vmatpush1.msra.mxu0 0.0
        %1221 = vmatprep.subr.mxu0 0.0
        %1222 = vmatpush1.msra.mxu0 0.0
        %1223 = vmatprep.mubr.f32.mxu0 0.0
        %1224 = vmatmul.mubr.f32.gmra.mrb[0].mxu0 %v441
        %v1225 = vpop.f32.mrb[0].mxu0
        %v1226 = vadd.f32 0.0, %v1225
        %v1227 = vpop.f32.mrb[0].mxu0
        %1228 = vmatprep.mubr.f32.mxu0 0.0
        %1229 = vmatmul.mubr.f32.gmra.mrb[0].mxu0 %v444
        %v1230 = vpop.f32.mrb[0].mxu0
        %v1231 = vadd.f32 0.0, %v1230
        %v1232 = vpop.f32.mrb[0].mxu0
        %1233 = vdwg.mxu0
        %1234 = vmatprep.subr.mxu0 0.0
        %1235 = vmatpush1.msra.mxu0 %v291
        %1236 = vmatprep.subr.mxu0 0.0
        %1237 = vmatpush1.msra.mxu0 %v292
        %1238 = vmatprep.subr.mxu0 0.0
        %1239 = vmatpush1.msra.mxu0 %v293
        %1240 = vmatprep.subr.mxu0 0.0
        %1241 = vmatpush1.msra.mxu0 %v294
        %1242 = vmatprep.subr.mxu0 0.0
        %1243 = vmatpush1.msra.mxu0 %v295
        %1244 = vmatprep.subr.mxu0 0.0
        %1245 = vmatpush1.msra.mxu0 %v296
        %1246 = vmatprep.subr.mxu0 0.0
        %1247 = vmatpush1.msra.mxu0 %v297
        %1248 = vmatprep.subr.mxu0 0.0
        %1249 = vmatpush1.msra.mxu0 %v298
        %1250 = vmatprep.subr.mxu0 0.0
        %1251 = vmatpush1.msra.mxu0 %v299
        %1252 = vmatprep.subr.mxu0 0.0
        %1253 = vmatpush1.msra.mxu0 %v300
        %1254 = vmatprep.subr.mxu0 0.0
        %1255 = vmatpush1.msra.mxu0 %v301
        %1256 = vmatprep.subr.mxu0 0.0
        %1257 = vmatpush1.msra.mxu0 %v302
        %1258 = vmatprep.subr.mxu0 0.0
        %1259 = vmatpush1.msra.mxu0 %v303
        %1260 = vmatprep.subr.mxu0 0.0
        %1261 = vmatpush1.msra.mxu0 %v304
        %1262 = vmatprep.subr.mxu0 0.0
        %1263 = vmatpush1.msra.mxu0 %v305
        %1264 = vmatprep.subr.mxu0 0.0
        %1265 = vmatpush1.msra.mxu0 %v306
        %1266 = vmatprep.subr.mxu0 0.0
        %1267 = vmatpush1.msra.mxu0 0.0
        %1268 = vmatprep.subr.mxu0 0.0
        %1269 = vmatpush1.msra.mxu0 0.0
        %1270 = vmatprep.subr.mxu0 0.0
        %1271 = vmatpush1.msra.mxu0 0.0
        %1272 = vmatprep.subr.mxu0 0.0
        %1273 = vmatpush1.msra.mxu0 0.0
        %1274 = vmatprep.subr.mxu0 0.0
        %1275 = vmatpush1.msra.mxu0 0.0
        %1276 = vmatprep.subr.mxu0 0.0
        %1277 = vmatpush1.msra.mxu0 0.0
        %1278 = vmatprep.subr.mxu0 0.0
        %1279 = vmatpush1.msra.mxu0 0.0
        %1280 = vmatprep.subr.mxu0 0.0
        %1281 = vmatpush1.msra.mxu0 0.0
        %1282 = vmatprep.subr.mxu0 0.0
        %1283 = vmatpush1.msra.mxu0 0.0
        %1284 = vmatprep.subr.mxu0 0.0
        %1285 = vmatpush1.msra.mxu0 0.0
        %1286 = vmatprep.subr.mxu0 0.0
        %1287 = vmatpush1.msra.mxu0 0.0
        %1288 = vmatprep.subr.mxu0 0.0
        %1289 = vmatpush1.msra.mxu0 0.0
        %1290 = vmatprep.subr.mxu0 0.0
        %1291 = vmatpush1.msra.mxu0 0.0
        %1292 = vmatprep.subr.mxu0 0.0
        %1293 = vmatpush1.msra.mxu0 0.0
        %1294 = vmatprep.subr.mxu0 0.0
        %1295 = vmatpush1.msra.mxu0 0.0
        %1296 = vmatprep.subr.mxu0 0.0
        %1297 = vmatpush1.msra.mxu0 0.0
        %1298 = vmatprep.mubr.f32.mxu0 0.0
        %1299 = vmatmul.mubr.f32.gmra.mrb[0].mxu0 %v1226
        %v1300 = vpop.f32.mrb[0].mxu0
        %v1301 = vadd.f32 0.0, %v1300
        %v1302 = vpop.f32.mrb[0].mxu0
        %1303 = vmatprep.mubr.f32.mxu0 0.0
        %1304 = vmatmul.mubr.f32.gmra.mrb[0].mxu0 %v1231
        %v1305 = vpop.f32.mrb[0].mxu0
        %v1306 = vadd.f32 0.0, %v1305
        %v1307 = vpop.f32.mrb[0].mxu0
        %1308 = vdwg.mxu0
        %1309 = vmatprep.subr.mxu0 0.0
        %1310 = vmatpush1.msra.mxu0 %v259
        %1311 = vmatprep.subr.mxu0 0.0
        %1312 = vmatpush1.msra.mxu0 %v260
        %1313 = vmatprep.subr.mxu0 0.0
        %1314 = vmatpush1.msra.mxu0 %v261
        %1315 = vmatprep.subr.mxu0 0.0
        %1316 = vmatpush1.msra.mxu0 %v262
        %1317 = vmatprep.subr.mxu0 0.0
        %1318 = vmatpush1.msra.mxu0 %v263
        %1319 = vmatprep.subr.mxu0 0.0
        %1320 = vmatpush1.msra.mxu0 %v264
        %1321 = vmatprep.subr.mxu0 0.0
        %1322 = vmatpush1.msra.mxu0 %v265
        %1323 = vmatprep.subr.mxu0 0.0
        %1324 = vmatpush1.msra.mxu0 %v266
        %1325 = vmatprep.subr.mxu0 0.0
        %1326 = vmatpush1.msra.mxu0 %v267
        %1327 = vmatprep.subr.mxu0 0.0
        %1328 = vmatpush1.msra.mxu0 %v268
        %1329 = vmatprep.subr.mxu0 0.0
        %1330 = vmatpush1.msra.mxu0 %v269
        %1331 = vmatprep.subr.mxu0 0.0
        %1332 = vmatpush1.msra.mxu0 %v270
        %1333 = vmatprep.subr.mxu0 0.0
        %1334 = vmatpush1.msra.mxu0 %v271
        %1335 = vmatprep.subr.mxu0 0.0
        %1336 = vmatpush1.msra.mxu0 %v272
        %1337 = vmatprep.subr.mxu0 0.0
        %1338 = vmatpush1.msra.mxu0 %v273
        %1339 = vmatprep.subr.mxu0 0.0
        %1340 = vmatpush1.msra.mxu0 %v274
        %1341 = vmatprep.subr.mxu0 0.0
        %1342 = vmatpush1.msra.mxu0 0.0
        %1343 = vmatprep.subr.mxu0 0.0
        %1344 = vmatpush1.msra.mxu0 0.0
        %1345 = vmatprep.subr.mxu0 0.0
        %1346 = vmatpush1.msra.mxu0 0.0
        %1347 = vmatprep.subr.mxu0 0.0
        %1348 = vmatpush1.msra.mxu0 0.0
        %1349 = vmatprep.subr.mxu0 0.0
        %1350 = vmatpush1.msra.mxu0 0.0
        %1351 = vmatprep.subr.mxu0 0.0
        %1352 = vmatpush1.msra.mxu0 0.0
        %1353 = vmatprep.subr.mxu0 0.0
        %1354 = vmatpush1.msra.mxu0 0.0
        %1355 = vmatprep.subr.mxu0 0.0
        %1356 = vmatpush1.msra.mxu0 0.0
        %1357 = vmatprep.subr.mxu0 0.0
        %1358 = vmatpush1.msra.mxu0 0.0
        %1359 = vmatprep.subr.mxu0 0.0
        %1360 = vmatpush1.msra.mxu0 0.0
        %1361 = vmatprep.subr.mxu0 0.0
        %1362 = vmatpush1.msra.mxu0 0.0
        %1363 = vmatprep.subr.mxu0 0.0
        %1364 = vmatpush1.msra.mxu0 0.0
        %1365 = vmatprep.subr.mxu0 0.0
        %1366 = vmatpush1.msra.mxu0 0.0
        %1367 = vmatprep.subr.mxu0 0.0
        %1368 = vmatpush1.msra.mxu0 0.0
        %1369 = vmatprep.subr.mxu0 0.0
        %1370 = vmatpush1.msra.mxu0 0.0
        %1371 = vmatprep.subr.mxu0 0.0
        %1372 = vmatpush1.msra.mxu0 0.0
        %1373 = vmatprep.mubr.f32.mxu0 0.0
        %1374 = vmatmul.mubr.f32.gmra.mrb[0].mxu0 %v1157
        %v1375 = vpop.f32.mrb[0].mxu0
        %v1376 = vadd.f32 %v1301, %v1375
        %v1377 = vpop.f32.mrb[0].mxu0
        %1378 = vmatprep.mubr.f32.mxu0 0.0
        %1379 = vmatmul.mubr.f32.gmra.mrb[0].mxu0 %v1158
        %v1380 = vpop.f32.mrb[0].mxu0
        %v1381 = vadd.f32 %v1306, %v1380
        %v1382 = vpop.f32.mrb[0].mxu0
        %1383 = vdwg.mxu0
        %v1384 = vadd.f32 %v1376, %v1152
        %v1385 = vadd.f32 %v1381, %v1152
        %v1386 = vmax.f32 %v1384, 0.0
        %v1387 = vmax.f32 %v1385, 0.0
        %v1389 = vsel %vm439, %v166, 0
        %1391 = vmatprep.subr.mxu0 0.0
        %1392 = vmatpush1.msra.mxu0 %v1386
        %1393 = vmatprep.subr.mxu0 0.0
        %1394 = vmatpush1.msra.mxu0 %v1387
        %1395 = vmatprep.subr.mxu0 0.0
        %1396 = vmatpush1.msra.mxu0 0.0
        %1397 = vmatprep.subr.mxu0 0.0
        %1398 = vmatpush1.msra.mxu0 0.0
        %1399 = vmatprep.subr.mxu0 0.0
        %1400 = vmatpush1.msra.mxu0 0.0
        %1401 = vmatprep.subr.mxu0 0.0
        %1402 = vmatpush1.msra.mxu0 0.0
        %1403 = vmatprep.subr.mxu0 0.0
        %1404 = vmatpush1.msra.mxu0 0.0
        %1405 = vmatprep.subr.mxu0 0.0
        %1406 = vmatpush1.msra.mxu0 0.0
        %1407 = vmatprep.subr.mxu0 0.0
        %1408 = vmatpush1.msra.mxu0 0.0
        %1409 = vmatprep.subr.mxu0 0.0
        %1410 = vmatpush1.msra.mxu0 0.0
        %1411 = vmatprep.subr.mxu0 0.0
        %1412 = vmatpush1.msra.mxu0 0.0
        %1413 = vmatprep.subr.mxu0 0.0
        %1414 = vmatpush1.msra.mxu0 0.0
        %1415 = vmatprep.subr.mxu0 0.0
        %1416 = vmatpush1.msra.mxu0 0.0
        %1417 = vmatprep.subr.mxu0 0.0
        %1418 = vmatpush1.msra.mxu0 0.0
        %1419 = vmatprep.subr.mxu0 0.0
        %1420 = vmatpush1.msra.mxu0 0.0
        %1421 = vmatprep.subr.mxu0 0.0
        %1422 = vmatpush1.msra.mxu0 0.0
        %1423 = vmatprep.subr.mxu0 0.0
        %1424 = vmatpush1.msra.mxu0 0.0
        %1425 = vmatprep.subr.mxu0 0.0
        %1426 = vmatpush1.msra.mxu0 0.0
        %1427 = vmatprep.subr.mxu0 0.0
        %1428 = vmatpush1.msra.mxu0 0.0
        %1429 = vmatprep.subr.mxu0 0.0
        %1430 = vmatpush1.msra.mxu0 0.0
        %1431 = vmatprep.subr.mxu0 0.0
        %1432 = vmatpush1.msra.mxu0 0.0
        %1433 = vmatprep.subr.mxu0 0.0
        %1434 = vmatpush1.msra.mxu0 0.0
        %1435 = vmatprep.subr.mxu0 0.0
        %1436 = vmatpush1.msra.mxu0 0.0
        %1437 = vmatprep.subr.mxu0 0.0
        %1438 = vmatpush1.msra.mxu0 0.0
        %1439 = vmatprep.subr.mxu0 0.0
        %1440 = vmatpush1.msra.mxu0 0.0
        %1441 = vmatprep.subr.mxu0 0.0
        %1442 = vmatpush1.msra.mxu0 0.0
        %1443 = vmatprep.subr.mxu0 0.0
        %1444 = vmatpush1.msra.mxu0 0.0
        %1445 = vmatprep.subr.mxu0 0.0
        %1446 = vmatpush1.msra.mxu0 0.0
        %1447 = vmatprep.subr.mxu0 0.0
        %1448 = vmatpush1.msra.mxu0 0.0
        %1449 = vmatprep.subr.mxu0 0.0
        %1450 = vmatpush1.msra.mxu0 0.0
        %1451 = vmatprep.subr.mxu0 0.0
        %1452 = vmatpush1.msra.mxu0 0.0
        %1453 = vmatprep.subr.mxu0 0.0
        %1454 = vmatpush1.msra.mxu0 0.0
        %1455 = vmatprep.mubr.f32.mxu0 0.0
        %1456 = vmatmul.mubr.f32.gmra.mrb[0].mxu0 %v1389
        %v1457 = vpop.f32.mrb[0].mxu0
        %v1458 = vadd.f32 0.0, %v1457
        %v1459 = vpop.f32.mrb[0].mxu0
        %1460 = vdwg.mxu0
        %1462 = vset.pattern.permute.xlu0 0
        %1463 = vperm.xlu0 %1462, %v169
        %v1464 = vpop.permute.xlu0 %1463
        %1467 = vset.pattern.permute.xlu0 0
        %1468 = vperm.xlu0 %1467, %v170
        %v1469 = vpop.permute.xlu0 %1468
        %v1471 = vadd.f32 %v1386, %v1464
        %v1472 = vadd.f32 %v1387, %v1469
        %v1473 = vmax.f32 %v1471, %v1472
        %v1474 = vrot.slane %v1473, 4
        %v1475 = vmax.f32 %v1473, %v1474
        %v1476 = vrot.slane %v1475, 2
        %v1477 = vmax.f32 %v1475, %v1476
        %v1478 = vrot.slane %v1477, 1
        %v1479 = vmax.f32 %v1477, %v1478
        %1480 = vset.pattern.permute.xlu0 1
        %1481 = vperm.xlu0 %1480, %v169
        %v1482 = vpop.permute.xlu0 %1481
        %1484 = vset.pattern.permute.xlu0 1
        %1485 = vperm.xlu0 %1484, %v170
        %v1486 = vpop.permute.xlu0 %1485
        %v1488 = vadd.f32 %v1386, %v1482
        %v1489 = vadd.f32 %v1387, %v1486
        %v1490 = vmax.f32 %v1488, %v1489
        %v1491 = vrot.slane %v1490, 4
        %v1492 = vmax.f32 %v1490, %v1491
        %v1493 = vrot.slane %v1492, 2
        %v1494 = vmax.f32 %v1492, %v1493
        %v1495 = vrot.slane %v1494, 1
        %v1496 = vmax.f32 %v1494, %v1495
        %1497 = vset.pattern.permute.xlu0 2
        %1498 = vperm.xlu0 %1497, %v169
        %v1499 = vpop.permute.xlu0 %1498
        %1501 = vset.pattern.permute.xlu0 2
        %1502 = vperm.xlu0 %1501, %v170
        %v1503 = vpop.permute.xlu0 %1502
        %v1505 = vadd.f32 %v1386, %v1499
        %v1506 = vadd.f32 %v1387, %v1503
        %v1507 = vmax.f32 %v1505, %v1506
        %v1508 = vrot.slane %v1507, 4
        %v1509 = vmax.f32 %v1507, %v1508
        %v1510 = vrot.slane %v1509, 2
        %v1511 = vmax.f32 %v1509, %v1510
        %v1512 = vrot.slane %v1511, 1
        %v1513 = vmax.f32 %v1511, %v1512
        %1514 = vset.pattern.permute.xlu0 3
        %1515 = vperm.xlu0 %1514, %v169
        %v1516 = vpop.permute.xlu0 %1515
        %1518 = vset.pattern.permute.xlu0 3
        %1519 = vperm.xlu0 %1518, %v170
        %v1520 = vpop.permute.xlu0 %1519
        %v1522 = vadd.f32 %v1386, %v1516
        %v1523 = vadd.f32 %v1387, %v1520
        %v1524 = vmax.f32 %v1522, %v1523
        %v1525 = vrot.slane %v1524, 4
        %v1526 = vmax.f32 %v1524, %v1525
        %v1527 = vrot.slane %v1526, 2
        %v1528 = vmax.f32 %v1526, %v1527
        %v1529 = vrot.slane %v1528, 1
        %v1530 = vmax.f32 %v1528, %v1529
        %1531 = vset.pattern.permute.xlu0 4
        %1532 = vperm.xlu0 %1531, %v169
        %v1533 = vpop.permute.xlu0 %1532
        %1535 = vset.pattern.permute.xlu0 4
        %1536 = vperm.xlu0 %1535, %v170
        %v1537 = vpop.permute.xlu0 %1536
        %v1539 = vadd.f32 %v1386, %v1533
        %v1540 = vadd.f32 %v1387, %v1537
        %v1541 = vmax.f32 %v1539, %v1540
        %v1542 = vrot.slane %v1541, 4
        %v1543 = vmax.f32 %v1541, %v1542
        %v1544 = vrot.slane %v1543, 2
        %v1545 = vmax.f32 %v1543, %v1544
        %v1546 = vrot.slane %v1545, 1
        %v1547 = vmax.f32 %v1545, %v1546
        %1548 = vset.pattern.permute.xlu0 5
        %1549 = vperm.xlu0 %1548, %v169
        %v1550 = vpop.permute.xlu0 %1549
        %1552 = vset.pattern.permute.xlu0 5
        %1553 = vperm.xlu0 %1552, %v170
        %v1554 = vpop.permute.xlu0 %1553
        %v1556 = vadd.f32 %v1386, %v1550
        %v1557 = vadd.f32 %v1387, %v1554
        %v1558 = vmax.f32 %v1556, %v1557
        %v1559 = vrot.slane %v1558, 4
        %v1560 = vmax.f32 %v1558, %v1559
        %v1561 = vrot.slane %v1560, 2
        %v1562 = vmax.f32 %v1560, %v1561
        %v1563 = vrot.slane %v1562, 1
        %v1564 = vmax.f32 %v1562, %v1563
        %1565 = vset.pattern.permute.xlu0 6
        %1566 = vperm.xlu0 %1565, %v169
        %v1567 = vpop.permute.xlu0 %1566
        %1569 = vset.pattern.permute.xlu0 6
        %1570 = vperm.xlu0 %1569, %v170
        %v1571 = vpop.permute.xlu0 %1570
        %v1573 = vadd.f32 %v1386, %v1567
        %v1574 = vadd.f32 %v1387, %v1571
        %v1575 = vmax.f32 %v1573, %v1574
        %v1576 = vrot.slane %v1575, 4
        %v1577 = vmax.f32 %v1575, %v1576
        %v1578 = vrot.slane %v1577, 2
        %v1579 = vmax.f32 %v1577, %v1578
        %v1580 = vrot.slane %v1579, 1
        %v1581 = vmax.f32 %v1579, %v1580
        %1582 = vset.pattern.permute.xlu0 7
        %1583 = vperm.xlu0 %1582, %v169
        %v1584 = vpop.permute.xlu0 %1583
        %1586 = vset.pattern.permute.xlu0 7
        %1587 = vperm.xlu0 %1586, %v170
        %v1588 = vpop.permute.xlu0 %1587
        %v1590 = vadd.f32 %v1386, %v1584
        %v1591 = vadd.f32 %v1387, %v1588
        %v1592 = vmax.f32 %v1590, %v1591
        %v1593 = vrot.slane %v1592, 4
        %v1594 = vmax.f32 %v1592, %v1593
        %v1595 = vrot.slane %v1594, 2
        %v1596 = vmax.f32 %v1594, %v1595
        %v1597 = vrot.slane %v1596, 1
        %v1598 = vmax.f32 %v1596, %v1597
        %vm1599 = vcmask 1040384
        %v1600 = vsel %vm1599, %v1479, %v1496
        %vm1601 = vcmask 1041408
        %v1602 = vsel %vm1601, %v1600, %v1513
        %vm1603 = vcmask 1042432
        %v1604 = vsel %vm1603, %v1602, %v1530
        %vm1605 = vcmask 1043456
        %v1606 = vsel %vm1605, %v1604, %v1547
        %vm1607 = vcmask 1044480
        %v1608 = vsel %vm1607, %v1606, %v1564
        %vm1609 = vcmask 1045504
        %v1610 = vsel %vm1609, %v1608, %v1581
        %vm1611 = vcmask 1046528
        %v1612 = vsel %vm1611, %v1610, %v1598
        %1613 = vmatprep.subr.mxu0 0.0
        %1614 = vmatpush1.msra.mxu0 %v355
        %1615 = vmatprep.subr.mxu0 0.0
        %1616 = vmatpush1.msra.mxu0 %v356
        %1617 = vmatprep.subr.mxu0 0.0
        %1618 = vmatpush1.msra.mxu0 %v357
        %1619 = vmatprep.subr.mxu0 0.0
        %1620 = vmatpush1.msra.mxu0 %v358
        %1621 = vmatprep.subr.mxu0 0.0
        %1622 = vmatpush1.msra.mxu0 %v359
        %1623 = vmatprep.subr.mxu0 0.0
        %1624 = vmatpush1.msra.mxu0 %v360
        %1625 = vmatprep.subr.mxu0 0.0
        %1626 = vmatpush1.msra.mxu0 %v361
        %1627 = vmatprep.subr.mxu0 0.0
        %1628 = vmatpush1.msra.mxu0 %v362
        %1629 = vmatprep.subr.mxu0 0.0
        %1630 = vmatpush1.msra.mxu0 %v363
        %1631 = vmatprep.subr.mxu0 0.0
        %1632 = vmatpush1.msra.mxu0 %v364
        %1633 = vmatprep.subr.mxu0 0.0
        %1634 = vmatpush1.msra.mxu0 %v365
        %1635 = vmatprep.subr.mxu0 0.0
        %1636 = vmatpush1.msra.mxu0 %v366
        %1637 = vmatprep.subr.mxu0 0.0
        %1638 = vmatpush1.msra.mxu0 %v367
        %1639 = vmatprep.subr.mxu0 0.0
        %1640 = vmatpush1.msra.mxu0 %v368
        %1641 = vmatprep.subr.mxu0 0.0
        %1642 = vmatpush1.msra.mxu0 %v369
        %1643 = vmatprep.subr.mxu0 0.0
        %1644 = vmatpush1.msra.mxu0 %v370
        %1645 = vmatprep.subr.mxu0 0.0
        %1646 = vmatpush1.msra.mxu0 0.0
        %1647 = vmatprep.subr.mxu0 0.0
        %1648 = vmatpush1.msra.mxu0 0.0
        %1649 = vmatprep.subr.mxu0 0.0
        %1650 = vmatpush1.msra.mxu0 0.0
        %1651 = vmatprep.subr.mxu0 0.0
        %1652 = vmatpush1.msra.mxu0 0.0
        %1653 = vmatprep.subr.mxu0 0.0
        %1654 = vmatpush1.msra.mxu0 0.0
        %1655 = vmatprep.subr.mxu0 0.0
        %1656 = vmatpush1.msra.mxu0 0.0
        %1657 = vmatprep.subr.mxu0 0.0
        %1658 = vmatpush1.msra.mxu0 0.0
        %1659 = vmatprep.subr.mxu0 0.0
        %1660 = vmatpush1.msra.mxu0 0.0
        %1661 = vmatprep.subr.mxu0 0.0
        %1662 = vmatpush1.msra.mxu0 0.0
        %1663 = vmatprep.subr.mxu0 0.0
        %1664 = vmatpush1.msra.mxu0 0.0
        %1665 = vmatprep.subr.mxu0 0.0
        %1666 = vmatpush1.msra.mxu0 0.0
        %1667 = vmatprep.subr.mxu0 0.0
        %1668 = vmatpush1.msra.mxu0 0.0
        %1669 = vmatprep.subr.mxu0 0.0
        %1670 = vmatpush1.msra.mxu0 0.0
        %1671 = vmatprep.subr.mxu0 0.0
        %1672 = vmatpush1.msra.mxu0 0.0
        %1673 = vmatprep.subr.mxu0 0.0
        %1674 = vmatpush1.msra.mxu0 0.0
        %1675 = vmatprep.subr.mxu0 0.0
        %1676 = vmatpush1.msra.mxu0 0.0
        %1677 = vmatprep.mubr.f32.mxu0 0.0
        %1678 = vmatmul.mubr.f32.gmra.mrb[0].mxu0 %v1458
        %v1679 = vpop.f32.mrb[0].mxu0
        %v1680 = vadd.f32 0.0, %v1679
        %v1681 = vpop.f32.mrb[0].mxu0
        %1682 = vdwg.mxu0
        %1683 = vmatprep.subr.mxu0 0.0
        %1684 = vmatpush1.msra.mxu0 %v323
        %1685 = vmatprep.subr.mxu0 0.0
        %1686 = vmatpush1.msra.mxu0 %v324
        %1687 = vmatprep.subr.mxu0 0.0
        %1688 = vmatpush1.msra.mxu0 %v325
        %1689 = vmatprep.subr.mxu0 0.0
        %1690 = vmatpush1.msra.mxu0 %v326
        %1691 = vmatprep.subr.mxu0 0.0
        %1692 = vmatpush1.msra.mxu0 %v327
        %1693 = vmatprep.subr.mxu0 0.0
        %1694 = vmatpush1.msra.mxu0 %v328
        %1695 = vmatprep.subr.mxu0 0.0
        %1696 = vmatpush1.msra.mxu0 %v329
        %1697 = vmatprep.subr.mxu0 0.0
        %1698 = vmatpush1.msra.mxu0 %v330
        %1699 = vmatprep.subr.mxu0 0.0
        %1700 = vmatpush1.msra.mxu0 %v331
        %1701 = vmatprep.subr.mxu0 0.0
        %1702 = vmatpush1.msra.mxu0 %v332
        %1703 = vmatprep.subr.mxu0 0.0
        %1704 = vmatpush1.msra.mxu0 %v333
        %1705 = vmatprep.subr.mxu0 0.0
        %1706 = vmatpush1.msra.mxu0 %v334
        %1707 = vmatprep.subr.mxu0 0.0
        %1708 = vmatpush1.msra.mxu0 %v335
        %1709 = vmatprep.subr.mxu0 0.0
        %1710 = vmatpush1.msra.mxu0 %v336
        %1711 = vmatprep.subr.mxu0 0.0
        %1712 = vmatpush1.msra.mxu0 %v337
        %1713 = vmatprep.subr.mxu0 0.0
        %1714 = vmatpush1.msra.mxu0 %v338
        %1715 = vmatprep.subr.mxu0 0.0
        %1716 = vmatpush1.msra.mxu0 0.0
        %1717 = vmatprep.subr.mxu0 0.0
        %1718 = vmatpush1.msra.mxu0 0.0
        %1719 = vmatprep.subr.mxu0 0.0
        %1720 = vmatpush1.msra.mxu0 0.0
        %1721 = vmatprep.subr.mxu0 0.0
        %1722 = vmatpush1.msra.mxu0 0.0
        %1723 = vmatprep.subr.mxu0 0.0
        %1724 = vmatpush1.msra.mxu0 0.0
        %1725 = vmatprep.subr.mxu0 0.0
        %1726 = vmatpush1.msra.mxu0 0.0
        %1727 = vmatprep.subr.mxu0 0.0
        %1728 = vmatpush1.msra.mxu0 0.0
        %1729 = vmatprep.subr.mxu0 0.0
        %1730 = vmatpush1.msra.mxu0 0.0
        %1731 = vmatprep.subr.mxu0 0.0
        %1732 = vmatpush1.msra.mxu0 0.0
        %1733 = vmatprep.subr.mxu0 0.0
        %1734 = vmatpush1.msra.mxu0 0.0
        %1735 = vmatprep.subr.mxu0 0.0
        %1736 = vmatpush1.msra.mxu0 0.0
        %1737 = vmatprep.subr.mxu0 0.0
        %1738 = vmatpush1.msra.mxu0 0.0
        %1739 = vmatprep.subr.mxu0 0.0
        %1740 = vmatpush1.msra.mxu0 0.0
        %1741 = vmatprep.subr.mxu0 0.0
        %1742 = vmatpush1.msra.mxu0 0.0
        %1743 = vmatprep.subr.mxu0 0.0
        %1744 = vmatpush1.msra.mxu0 0.0
        %1745 = vmatprep.subr.mxu0 0.0
        %1746 = vmatpush1.msra.mxu0 0.0
        %1747 = vmatprep.mubr.f32.mxu0 0.0
        %1748 = vmatmul.mubr.f32.gmra.mrb[0].mxu0 %v1612
        %v1749 = vpop.f32.mrb[0].mxu0
        %v1750 = vadd.f32 %v1680, %v1749
        %v1751 = vpop.f32.mrb[0].mxu0
        %1752 = vdwg.mxu0
        %v1753 = vlaneseq
        %v1754 = vshrl.u32 %v1753, 7
        %v1755 = vsub.s32 3, %v1754
        %v1756 = vrot.slane %v436, %v1755
        %v1757 = vadd.f32 %v1750, %v1756
        %v1758 = vmax.f32 %v1757, 0.0
        %v1759 = vlaneseq
        %v1760 = vshrl.u32 %v1759, 7
        %v1761 = vsub.s32 0, %v1760
        %v1762 = vrot.slane %v438, %v1761
        %1763 = vmatprep.subr.mxu0 0.0
        %1764 = vmatpush1.msra.mxu0 %v387
        %1765 = vmatprep.subr.mxu0 0.0
        %1766 = vmatpush1.msra.mxu0 %v388
        %1767 = vmatprep.subr.mxu0 0.0
        %1768 = vmatpush1.msra.mxu0 %v389
        %1769 = vmatprep.subr.mxu0 0.0
        %1770 = vmatpush1.msra.mxu0 %v390
        %1771 = vmatprep.subr.mxu0 0.0
        %1772 = vmatpush1.msra.mxu0 %v391
        %1773 = vmatprep.subr.mxu0 0.0
        %1774 = vmatpush1.msra.mxu0 %v392
        %1775 = vmatprep.subr.mxu0 0.0
        %1776 = vmatpush1.msra.mxu0 %v393
        %1777 = vmatprep.subr.mxu0 0.0
        %1778 = vmatpush1.msra.mxu0 %v394
        %1779 = vmatprep.subr.mxu0 0.0
        %1780 = vmatpush1.msra.mxu0 %v395
        %1781 = vmatprep.subr.mxu0 0.0
        %1782 = vmatpush1.msra.mxu0 %v396
        %1783 = vmatprep.subr.mxu0 0.0
        %1784 = vmatpush1.msra.mxu0 %v397
        %1785 = vmatprep.subr.mxu0 0.0
        %1786 = vmatpush1.msra.mxu0 %v398
        %1787 = vmatprep.subr.mxu0 0.0
        %1788 = vmatpush1.msra.mxu0 %v399
        %1789 = vmatprep.subr.mxu0 0.0
        %1790 = vmatpush1.msra.mxu0 %v400
        %1791 = vmatprep.subr.mxu0 0.0
        %1792 = vmatpush1.msra.mxu0 %v401
        %1793 = vmatprep.subr.mxu0 0.0
        %1794 = vmatpush1.msra.mxu0 %v402
        %1795 = vmatprep.subr.mxu0 0.0
        %1796 = vmatpush1.msra.mxu0 0.0
        %1797 = vmatprep.subr.mxu0 0.0
        %1798 = vmatpush1.msra.mxu0 0.0
        %1799 = vmatprep.subr.mxu0 0.0
        %1800 = vmatpush1.msra.mxu0 0.0
        %1801 = vmatprep.subr.mxu0 0.0
        %1802 = vmatpush1.msra.mxu0 0.0
        %1803 = vmatprep.subr.mxu0 0.0
        %1804 = vmatpush1.msra.mxu0 0.0
        %1805 = vmatprep.subr.mxu0 0.0
        %1806 = vmatpush1.msra.mxu0 0.0
        %1807 = vmatprep.subr.mxu0 0.0
        %1808 = vmatpush1.msra.mxu0 0.0
        %1809 = vmatprep.subr.mxu0 0.0
        %1810 = vmatpush1.msra.mxu0 0.0
        %1811 = vmatprep.subr.mxu0 0.0
        %1812 = vmatpush1.msra.mxu0 0.0
        %1813 = vmatprep.subr.mxu0 0.0
        %1814 = vmatpush1.msra.mxu0 0.0
        %1815 = vmatprep.subr.mxu0 0.0
        %1816 = vmatpush1.msra.mxu0 0.0
        %1817 = vmatprep.subr.mxu0 0.0
        %1818 = vmatpush1.msra.mxu0 0.0
        %1819 = vmatprep.subr.mxu0 0.0
        %1820 = vmatpush1.msra.mxu0 0.0
        %1821 = vmatprep.subr.mxu0 0.0
        %1822 = vmatpush1.msra.mxu0 0.0
        %1823 = vmatprep.subr.mxu0 0.0
        %1824 = vmatpush1.msra.mxu0 0.0
        %1825 = vmatprep.subr.mxu0 0.0
        %1826 = vmatpush1.msra.mxu0 0.0
        %1827 = vmatprep.mubr.f32.mxu0 0.0
        %1828 = vmatmul.mubr.f32.gmra.mrb[0].mxu0 %v1758
        %v1829 = vpop.f32.mrb[0].mxu0
        %v1830 = vadd.f32 %v1762, %v1829
        %v1831 = vpop.f32.mrb[0].mxu0
        %1832 = vdwg.mxu0
        %v1833 = vmax.f32 %v1830, 0.0
        %v1834 = vlaneseq
        %v1835 = vshrl.u32 %v1834, 7
        %v1836 = vsub.s32 1, %v1835
        %v1837 = vrot.slane %v438, %v1836
        %1838 = vmatprep.subr.mxu0 0.0
        %1839 = vmatpush1.msra.mxu0 %v419
        %1840 = vmatprep.subr.mxu0 0.0
        %1841 = vmatpush1.msra.mxu0 %v420
        %1842 = vmatprep.subr.mxu0 0.0
        %1843 = vmatpush1.msra.mxu0 %v421
        %1844 = vmatprep.subr.mxu0 0.0
        %1845 = vmatpush1.msra.mxu0 %v422
        %1846 = vmatprep.subr.mxu0 0.0
        %1847 = vmatpush1.msra.mxu0 %v423
        %1848 = vmatprep.subr.mxu0 0.0
        %1849 = vmatpush1.msra.mxu0 %v424
        %1850 = vmatprep.subr.mxu0 0.0
        %1851 = vmatpush1.msra.mxu0 %v425
        %1852 = vmatprep.subr.mxu0 0.0
        %1853 = vmatpush1.msra.mxu0 %v426
        %1854 = vmatprep.subr.mxu0 0.0
        %1855 = vmatpush1.msra.mxu0 %v427
        %1856 = vmatprep.subr.mxu0 0.0
        %1857 = vmatpush1.msra.mxu0 %v428
        %1858 = vmatprep.subr.mxu0 0.0
        %1859 = vmatpush1.msra.mxu0 %v429
        %1860 = vmatprep.subr.mxu0 0.0
        %1861 = vmatpush1.msra.mxu0 %v430
        %1862 = vmatprep.subr.mxu0 0.0
        %1863 = vmatpush1.msra.mxu0 %v431
        %1864 = vmatprep.subr.mxu0 0.0
        %1865 = vmatpush1.msra.mxu0 %v432
        %1866 = vmatprep.subr.mxu0 0.0
        %1867 = vmatpush1.msra.mxu0 %v433
        %1868 = vmatprep.subr.mxu0 0.0
        %1869 = vmatpush1.msra.mxu0 %v434
        %1870 = vmatprep.subr.mxu0 0.0
        %1871 = vmatpush1.msra.mxu0 0.0
        %1872 = vmatprep.subr.mxu0 0.0
        %1873 = vmatpush1.msra.mxu0 0.0
        %1874 = vmatprep.subr.mxu0 0.0
        %1875 = vmatpush1.msra.mxu0 0.0
        %1876 = vmatprep.subr.mxu0 0.0
        %1877 = vmatpush1.msra.mxu0 0.0
        %1878 = vmatprep.subr.mxu0 0.0
        %1879 = vmatpush1.msra.mxu0 0.0
        %1880 = vmatprep.subr.mxu0 0.0
        %1881 = vmatpush1.msra.mxu0 0.0
        %1882 = vmatprep.subr.mxu0 0.0
        %1883 = vmatpush1.msra.mxu0 0.0
        %1884 = vmatprep.subr.mxu0 0.0
        %1885 = vmatpush1.msra.mxu0 0.0
        %1886 = vmatprep.subr.mxu0 0.0
        %1887 = vmatpush1.msra.mxu0 0.0
        %1888 = vmatprep.subr.mxu0 0.0
        %1889 = vmatpush1.msra.mxu0 0.0
        %1890 = vmatprep.subr.mxu0 0.0
        %1891 = vmatpush1.msra.mxu0 0.0
        %1892 = vmatprep.subr.mxu0 0.0
        %1893 = vmatpush1.msra.mxu0 0.0
        %1894 = vmatprep.subr.mxu0 0.0
        %1895 = vmatpush1.msra.mxu0 0.0
        %1896 = vmatprep.subr.mxu0 0.0
        %1897 = vmatpush1.msra.mxu0 0.0
        %1898 = vmatprep.subr.mxu0 0.0
        %1899 = vmatpush1.msra.mxu0 0.0
        %1900 = vmatprep.subr.mxu0 0.0
        %1901 = vmatpush1.msra.mxu0 0.0
        %1902 = vmatprep.mubr.f32.mxu0 0.0
        %1903 = vmatmul.mubr.f32.gmra.mrb[0].mxu0 %v1833
        %v1904 = vpop.f32.mrb[0].mxu0
        %v1905 = vadd.f32 %v1837, %v1904
        %v1906 = vpop.f32.mrb[0].mxu0
        %1907 = vdwg.mxu0
        %v1908 = vlaneseq
        %v1909 = vand.u32 %v1908, 127
        %vm1910 = vcmp.lt.s32.totalorder %v1909, 6
        %v1911 = vsel %vm1910, %v1905, -1e+30
        %1912 = vmax.xlane.f32.xlu0 %v1911
        %v1913 = vpop.xlane.xlu0 %1912
        %v1914 = vsub.f32 %v1911, %v1913
        %v1915 = vmul.f32 %v1914, 1.442695
        %v1916 = vpow.pop %v1915
        %1917 = vadd.xlane.f32.xlu0 %v1916
        %v1918 = vpop.xlane.xlu0 %1917
        %v1919 = vlog2.pop %v1918
        %v1920 = vmul.f32 %v1919, 0.6931472
        %v1921 = vadd.f32 %v1913, %v1920
        %v1922 = vsub.f32 %v1911, %v1921
        %1923 = vst [vmem:[%s151] sm:$0xff] %v1922
        %s1924 = sand.u32 %s72, 1
        %s1925 = scalar_lea.sflag [#allocation4], %s1924
        %s1926 = sand.u32 %s72, 1
        %s1927 = smul.addr %s1926, 8
        %s1928 = scalar_lea.vmem [#allocation5], %s1927
        // Predicated region
        $region33: #{tpu_custom_call.1} parent=27 // pred_check
          %p1929 = pneg %p82
        $region34: #{tpu_custom_call.1} parent=27 // pred_check_branch
          %1931 = sbr.rel (%p1929) target = $region36
        $region35: #{tpu_custom_call.1} parent=27 // pred_region
          %s1933 = ssub.s32 128, 128
          %1934 = vsyncadd %s1925, %s1933
          %s1935 = smul.addr %s17, 128
          %s1936 = scalar_lea.hbm %s2, %s1935
          %s1938 = sshll.u32 %s1928, 4
          %s1939 = int_to_ptr.vmem [resolvable:$true] %s1938
          %1941 = dma.vmem_to_hbm [thread:$0]  %s1939, 128, %s1936, %s1925
        $region36: #{tpu_custom_call.1} parent=27 // pred_fallthru
          _
      $region28: #{tpu_custom_call.1} parent=5 // pred_fallthru
        _
      %p1942 = scmp.le.s32.totalorder 2, %s12
      // Predicated region
      $region37: #{tpu_custom_call.1} parent=5 // pred_check
        %p1943 = pneg %p1942
      $region38: #{tpu_custom_call.1} parent=5 // pred_check_branch
        %1945 = sbr.rel (%p1943) target = $region40
      $region39: #{tpu_custom_call.1} parent=5 // pred_region
        %s1946 = ssub.s32 %s12, 2
        // Predicated region
        $region41: #{tpu_custom_call.1} parent=39 // pred_check
          %p1947 = pneg %p88
        $region42: #{tpu_custom_call.1} parent=39 // pred_check_branch
          %1949 = sbr.rel (%p1947) target = $region44
        $region43: #{tpu_custom_call.1} parent=39 // pred_region
          %s1950 = sand.u32 %s73, 1
          %s1951 = scalar_lea.sflag [#allocation4], %s1950
          %s1952 = sand.u32 %s73, 1
          %s1953 = smul.addr %s1952, 8
          %s1954 = scalar_lea.vmem [#allocation5], %s1953
          %1955 = dma.done %s1951, 128
        $region44: #{tpu_custom_call.1} parent=39 // pred_fallthru
          _
      $region40: #{tpu_custom_call.1} parent=5 // pred_fallthru
        _
    $region6: #{tpu_custom_call.1} parent=1 // loop_footer
      %s16 = sadd.s32 1, %s12
    $region7: #{tpu_custom_call.1} parent=1 // loop_footer_branch
      %11 = sbr.rel target = $region3
    $region8: #{tpu_custom_call.1} parent=1 // loop_exit
      _
    %1956 = vsyncpa [#allocation3], 1
    %s1957 = scalar_lea.sflag [#allocation3], 1
    %1958 = vsyncpa %s1957, 1
    %1959 = vsyncpa [#allocation4], 1
    %s1960 = scalar_lea.sflag [#allocation4], 1
    %1961 = vsyncpa %s1960, 1

</llo_original>
